<compile_context>
chip_gen: v7x
topology: tpu7x:2x2x1
jax: 0.10.0
libtpu: 0.0.40
codegen_flags: <defaults>
</compile_context>

<pallas_src>
import functools

import jax
import jax.numpy as jnp
from jax import lax
from jax.experimental import pallas as pl
from jax.experimental.pallas import tpu as pltpu


def _relational_mlp_kernel(x_ref,
                           w1_ref, b1_ref,
                           w2_ref, b2_ref,
                           w3_ref, b3_ref,
                           w4_ref, b4_ref,
                           o_ref,
                           *, out_features, use_bf16, row_major_out):
    """One row-tile of the 4-layer MLP, computed with rows on the lane axis.

    x_ref : (row_tile, input_size)           natural row-major input block
    w_i   : (out_features_i, in_features_i)  PyTorch Linear layout
    b_i   : (out_features_i, 1)
    o_ref : (row_tile, out_features)         if row_major_out
            (out_pad, row_tile)              otherwise (transposed fallback)
    """
    x = x_ref[...]  # f32, streamed from HBM

    # Layer 1: rhs-transposed contraction so the result lands as
    # [hidden, rows] with the row dimension on the 128-wide lane axis.
    # Kept in f32 (the streamed input is not down-cast).
    h = lax.dot_general(w1_ref[...], x, (((1,), (1,)), ((), ())),
                        preferred_element_type=jnp.float32)
    h = jnp.maximum(h + b1_ref[...], 0.0)

    def layer(w_ref, b_ref, h):
        w = w_ref[...]
        if use_bf16:
            # bf16 operands, f32 accumulate: avoids the 3-6x multi-pass f32
            # MXU lowering.  Bias add / ReLU stay in f32.
            w = w.astype(jnp.bfloat16)
            h = h.astype(jnp.bfloat16)
        y = jnp.dot(w, h, preferred_element_type=jnp.float32)
        return jnp.maximum(y + b_ref[...], 0.0)

    h = layer(w2_ref, b2_ref, h)
    h = layer(w3_ref, b3_ref, h)
    h = layer(w4_ref, b4_ref, h)      # (out_pad, row_tile); padded rows are 0

    if row_major_out:
        # Single in-kernel XLU relayout ((8, row_tile) -> (row_tile, 8)) so the
        # output leaves the kernel already row-major: no wrapper-side XLA
        # transpose, i.e. no extra HBM pass over the output.
        ht = jnp.transpose(h)         # (row_tile, out_pad)
        o_ref[...] = ht[:, :out_features].astype(o_ref.dtype)
    else:
        # Fallback layout: lane-dense transposed output (wrapper transposes).
        o_ref[...] = h.astype(o_ref.dtype)


@functools.partial(jax.jit,
                   static_argnames=("row_tile", "use_bf16_matmul", "row_major_out"))
def relational_model(x, params, *, row_tile=8192, use_bf16_matmul=False,
                     row_major_out=True):
    """Pallas implementation of RelationalModel.forward.

    Args:
      x: [batch_size, n_relations, input_size] float32
      params: dict with w1..w4 ([out_features, in_features], PyTorch layout)
              and b1..b4 ([out_features, 1]).
      row_tile: requested rows per grid step (auto-clamped by VMEM budget and
                by the keep-grid>=2 rule).
      use_bf16_matmul: cast hidden matmul operands to bf16 (f32 accumulate).
      row_major_out: emit the output row-major from the kernel (default); the
                False path is the previously-validated transposed-output layout.
    Returns:
      [batch_size, n_relations, output_size] float32
    """
    batch_size, n_relations, input_size = x.shape
    hidden_size = params["w2"].shape[0]
    output_size = params["w4"].shape[0]
    n_rows = batch_size * n_relations
    x2d = x.reshape(n_rows, input_size)

    # Zero-pad the last layer to a multiple of 8 output rows so the in-kernel
    # transpose operand has a full sublane dimension (padded rows are
    # ReLU(0) = 0 and are sliced away before the store).
    out_pad = max(8, ((output_size + 7) // 8) * 8)
    w4, b4 = params["w4"], params["b4"]
    if out_pad != output_size:
        w4 = jnp.zeros((out_pad, hidden_size), w4.dtype).at[:output_size].set(w4)
        b4 = jnp.zeros((out_pad, 1), b4.dtype).at[:output_size].set(b4)

    # ---- Row-tile selection with padding-aware VMEM accounting ----
    # The (row_tile, input_size) x block and the (row_tile, output_size) out
    # block both lane-pad to 128 lanes in VMEM and are double-buffered; the
    # transposed f32 intermediates and the transpose temporary are counted once.
    LANE = 128
    itemsize = 4
    per_row = itemsize * (2 * LANE                    # x block (x2 buffers, lane-padded)
                          + 2 * LANE                  # out block (x2 buffers, lane-padded)
                          + 3 * hidden_size + out_pad  # h1..h4 intermediates
                          + LANE)                     # in-kernel transpose temporary
    fixed = 2 * 1024 * 1024                           # resident params (padded) + slack
    vmem_budget = 40 * 1024 * 1024                    # v7x physical VMEM is only 64 MiB

    tile = min(row_tile, max(256, ((vmem_budget - fixed) // per_row) // 256 * 256))
    tile = max(256, (tile // 256) * 256)
    if n_rows < 2 * 256:
        tile = n_rows                                  # tiny problem: one block
    else:
        # Keep >= 2 grid steps so dimension_semantics=("parallel",) can split
        # the row axis across both TensorCores on v7x.
        tile = min(tile, max(256, ((n_rows // 2) // 256) * 256))

    grid = (pl.cdiv(n_rows, tile),)   # partial last block is masked by Pallas

    vmem_need = fixed + per_row * tile
    vmem_limit = int(min(max(vmem_need + (8 << 20), 24 << 20), 48 << 20))
    compiler_params = pltpu.CompilerParams(
        dimension_semantics=("parallel",),
        vmem_limit_bytes=vmem_limit,
    )

    def full_spec(arr):
        # Small parameter, fully VMEM-resident; constant block index so it is
        # not re-DMA'd across grid steps.
        return pl.BlockSpec(arr.shape, lambda i: (0, 0))

    kernel = functools.partial(_relational_mlp_kernel,
                               out_features=output_size,
                               use_bf16=use_bf16_matmul,
                               row_major_out=row_major_out)

    if row_major_out:
        out_shape = jax.ShapeDtypeStruct((n_rows, output_size), x.dtype)
        out_spec = pl.BlockSpec((tile, output_size), lambda i: (i, 0))
    else:
        out_shape = jax.ShapeDtypeStruct((out_pad, n_rows), x.dtype)
        out_spec = pl.BlockSpec((out_pad, tile), lambda i: (0, i))

    out = pl.pallas_call(
        kernel,
        out_shape=out_shape,
        grid_spec=pltpu.PrefetchScalarGridSpec(
            num_scalar_prefetch=0,
            grid=grid,
            in_specs=[
                pl.BlockSpec((tile, input_size), lambda i: (i, 0)),
                full_spec(params["w1"]), full_spec(params["b1"]),
                full_spec(params["w2"]), full_spec(params["b2"]),
                full_spec(params["w3"]), full_spec(params["b3"]),
                full_spec(w4), full_spec(b4),
            ],
            out_specs=out_spec,
        ),
        compiler_params=compiler_params,
    )(x2d,
      params["w1"], params["b1"],
      params["w2"], params["b2"],
      params["w3"], params["b3"],
      w4, b4)

    if row_major_out:
        return out.reshape(batch_size, n_relations, output_size)
    # Fallback layout: one extra XLA transpose pass over the (small) output.
    return out[:output_size, :].T.reshape(batch_size, n_relations, output_size)


def init_params(key, input_size, hidden_size, output_size):
    """Deterministic synthetic parameters (PyTorch-Linear-like uniform init)."""
    dims = [(hidden_size, input_size),
            (hidden_size, hidden_size),
            (hidden_size, hidden_size),
            (output_size, hidden_size)]
    params = {}
    keys = jax.random.split(key, 2 * len(dims))
    for idx, (fan_out, fan_in) in enumerate(dims):
        bound = 1.0 / (fan_in ** 0.5)
        params[f"w{idx + 1}"] = jax.random.uniform(
            keys[2 * idx], (fan_out, fan_in), minval=-bound, maxval=bound,
            dtype=jnp.float32)
        params[f"b{idx + 1}"] = jax.random.uniform(
            keys[2 * idx + 1], (fan_out, 1), minval=-bound, maxval=bound,
            dtype=jnp.float32)
    return params


def reference_forward(x, params):
    """Plain-JAX reference matching the PyTorch module semantics."""
    b, r, d = x.shape
    h = x.reshape(-1, d)
    for i in range(1, 5):
        w = params[f"w{i}"]
        bias = params[f"b{i}"][:, 0][None, :]
        h = jnp.maximum(h @ w.T + bias, 0.0)
    return h.reshape(b, r, -1)


if __name__ == "__main__":
    key = jax.random.PRNGKey(0)
    k_x, k_p, k_x2 = jax.random.split(key, 3)

    input_size, hidden_size, output_size = 6, 32, 4
    params = init_params(k_p, input_size, hidden_size, output_size)

    def run(x, **kw):
        return jax.block_until_ready(relational_model(x, params, **kw))

    # Case 1: single full tile (batch=2, n_relations=128 -> 256 rows).
    x1 = jax.random.normal(k_x, (2, 128, input_size), dtype=jnp.float32)
    ref1 = reference_forward(x1, params)
    try:
        out1 = run(x1)                      # row-major output (no XLA transpose)
        row_major = True
    except Exception:
        # Defensive fallback to the previously-validated transposed-output
        # layout if the in-kernel relayout does not lower on this toolchain.
        out1 = run(x1, row_major_out=False)
        row_major = False
    assert out1.shape == (2, 128, output_size), out1.shape
    assert jnp.allclose(out1, ref1, atol=1e-5, rtol=1e-5), \
        float(jnp.max(jnp.abs(out1 - ref1)))

    # Case 2: multi-step grid with a masked partial last tile
    # (batch=4, n_relations=296 -> 1184 rows, tile=512 -> grid of 3).
    x2 = jax.random.normal(k_x2, (4, 296, input_size), dtype=jnp.float32)
    ref2 = reference_forward(x2, params)
    out2 = run(x2, row_major_out=row_major)
    assert out2.shape == (4, 296, output_size), out2.shape
    assert jnp.allclose(out2, ref2, atol=1e-5, rtol=1e-5), \
        float(jnp.max(jnp.abs(out2 - ref2)))

    # Case 3: optional bf16-matmul-operand path (f32 accumulate); looser
    # tolerance because hidden-layer operands are rounded to bf16.
    out3 = run(x1, row_major_out=row_major, use_bf16_matmul=True)
    assert out3.shape == ref1.shape
    assert jnp.allclose(out3, ref1, atol=3e-2, rtol=5e-2), \
        float(jnp.max(jnp.abs(out3 - ref1)))

    print("KERNEL_OK")
</pallas_src>

<mosaic_0001>
module attributes {stable_mosaic.version = 11 : i64} {
  func.func @_relational_mlp_kernel(%arg0: i32, %arg1: memref<256x6xf32, #tpu.memory_space<vmem>>, %arg2: memref<32x6xf32, #tpu.memory_space<vmem>>, %arg3: memref<32x1xf32, #tpu.memory_space<vmem>>, %arg4: memref<32x32xf32, #tpu.memory_space<vmem>>, %arg5: memref<32x1xf32, #tpu.memory_space<vmem>>, %arg6: memref<32x32xf32, #tpu.memory_space<vmem>>, %arg7: memref<32x1xf32, #tpu.memory_space<vmem>>, %arg8: memref<8x32xf32, #tpu.memory_space<vmem>>, %arg9: memref<8x1xf32, #tpu.memory_space<vmem>>, %arg10: memref<256x4xf32, #tpu.memory_space<vmem>>) attributes {dimension_semantics = [#tpu.dimension_semantics<parallel>], iteration_bounds = array<i64: 1>, scalar_prefetch = 0 : i64, scratch_operands = 0 : i64, tpu.core_type = #tpu.core_type<tc>, window_params = [{transform_indices = @transform_0, window_bounds = array<i64: 256, 6>}, {pipeline_mode = #tpu.pipeline_mode<synchronous>, transform_indices = @transform_1, window_bounds = array<i64: 32, 6>}, {pipeline_mode = #tpu.pipeline_mode<synchronous>, transform_indices = @transform_2, window_bounds = array<i64: 32, 1>}, {pipeline_mode = #tpu.pipeline_mode<synchronous>, transform_indices = @transform_3, window_bounds = array<i64: 32, 32>}, {pipeline_mode = #tpu.pipeline_mode<synchronous>, transform_indices = @transform_4, window_bounds = array<i64: 32, 1>}, {pipeline_mode = #tpu.pipeline_mode<synchronous>, transform_indices = @transform_5, window_bounds = array<i64: 32, 32>}, {pipeline_mode = #tpu.pipeline_mode<synchronous>, transform_indices = @transform_6, window_bounds = array<i64: 32, 1>}, {pipeline_mode = #tpu.pipeline_mode<synchronous>, transform_indices = @transform_7, window_bounds = array<i64: 8, 32>}, {pipeline_mode = #tpu.pipeline_mode<synchronous>, transform_indices = @transform_8, window_bounds = array<i64: 8, 1>}, {transform_indices = @transform_9, window_bounds = array<i64: 256, 4>}]} {
    %c0 = arith.constant 0 : index
    %c0_0 = arith.constant 0 : index
    %0 = vector.load %arg1[%c0, %c0_0] : memref<256x6xf32, #tpu.memory_space<vmem>>, vector<256x6xf32>
    %c0_1 = arith.constant 0 : index
    %c0_2 = arith.constant 0 : index
    %1 = vector.load %arg2[%c0_1, %c0_2] : memref<32x6xf32, #tpu.memory_space<vmem>>, vector<32x6xf32>
    %cst = arith.constant dense<0.000000e+00> : vector<32x256xf32>
    %2 = tpu.matmul %1, %0, %cst {dimension_numbers = #tpu.dot_dimension_numbers<[1], [1], [0], [0], [0, 0, 1, 0], [], []>} : vector<32x6xf32>, vector<256x6xf32>, vector<32x256xf32> -> vector<32x256xf32>
    %c0_3 = arith.constant 0 : index
    %c0_4 = arith.constant 0 : index
    %3 = vector.load %arg3[%c0_3, %c0_4] : memref<32x1xf32, #tpu.memory_space<vmem>>, vector<32x1xf32>
    %4 = vector.broadcast %3 : vector<32x1xf32> to vector<32x256xf32>
    %5 = arith.addf %2, %4 : vector<32x256xf32>
    %cst_5 = arith.constant 0.000000e+00 : f32
    %6 = vector.broadcast %cst_5 : f32 to vector<32x256xf32>
    %7 = arith.maximumf %5, %6 : vector<32x256xf32>
    %c0_6 = arith.constant 0 : index
    %c0_7 = arith.constant 0 : index
    %8 = vector.load %arg4[%c0_6, %c0_7] : memref<32x32xf32, #tpu.memory_space<vmem>>, vector<32x32xf32>
    %cst_8 = arith.constant dense<0.000000e+00> : vector<32x256xf32>
    %9 = tpu.matmul %8, %7, %cst_8 {dimension_numbers = #tpu.dot_dimension_numbers<[1], [0], [0], [1], [0, 0, 1, 1], [], []>} : vector<32x32xf32>, vector<32x256xf32>, vector<32x256xf32> -> vector<32x256xf32>
    %c0_9 = arith.constant 0 : index
    %c0_10 = arith.constant 0 : index
    %10 = vector.load %arg5[%c0_9, %c0_10] : memref<32x1xf32, #tpu.memory_space<vmem>>, vector<32x1xf32>
    %11 = vector.broadcast %10 : vector<32x1xf32> to vector<32x256xf32>
    %12 = arith.addf %9, %11 : vector<32x256xf32>
    %cst_11 = arith.constant 0.000000e+00 : f32
    %13 = vector.broadcast %cst_11 : f32 to vector<32x256xf32>
    %14 = arith.maximumf %12, %13 : vector<32x256xf32>
    %c0_12 = arith.constant 0 : index
    %c0_13 = arith.constant 0 : index
    %15 = vector.load %arg6[%c0_12, %c0_13] : memref<32x32xf32, #tpu.memory_space<vmem>>, vector<32x32xf32>
    %cst_14 = arith.constant dense<0.000000e+00> : vector<32x256xf32>
    %16 = tpu.matmul %15, %14, %cst_14 {dimension_numbers = #tpu.dot_dimension_numbers<[1], [0], [0], [1], [0, 0, 1, 1], [], []>} : vector<32x32xf32>, vector<32x256xf32>, vector<32x256xf32> -> vector<32x256xf32>
    %c0_15 = arith.constant 0 : index
    %c0_16 = arith.constant 0 : index
    %17 = vector.load %arg7[%c0_15, %c0_16] : memref<32x1xf32, #tpu.memory_space<vmem>>, vector<32x1xf32>
    %18 = vector.broadcast %17 : vector<32x1xf32> to vector<32x256xf32>
    %19 = arith.addf %16, %18 : vector<32x256xf32>
    %cst_17 = arith.constant 0.000000e+00 : f32
    %20 = vector.broadcast %cst_17 : f32 to vector<32x256xf32>
    %21 = arith.maximumf %19, %20 : vector<32x256xf32>
    %c0_18 = arith.constant 0 : index
    %c0_19 = arith.constant 0 : index
    %22 = vector.load %arg8[%c0_18, %c0_19] : memref<8x32xf32, #tpu.memory_space<vmem>>, vector<8x32xf32>
    %cst_20 = arith.constant dense<0.000000e+00> : vector<8x256xf32>
    %23 = tpu.matmul %22, %21, %cst_20 {dimension_numbers = #tpu.dot_dimension_numbers<[1], [0], [0], [1], [0, 0, 1, 1], [], []>} : vector<8x32xf32>, vector<32x256xf32>, vector<8x256xf32> -> vector<8x256xf32>
    %c0_21 = arith.constant 0 : index
    %c0_22 = arith.constant 0 : index
    %24 = vector.load %arg9[%c0_21, %c0_22] : memref<8x1xf32, #tpu.memory_space<vmem>>, vector<8x1xf32>
    %25 = vector.broadcast %24 : vector<8x1xf32> to vector<8x256xf32>
    %26 = arith.addf %23, %25 : vector<8x256xf32>
    %cst_23 = arith.constant 0.000000e+00 : f32
    %27 = vector.broadcast %cst_23 : f32 to vector<8x256xf32>
    %28 = arith.maximumf %26, %27 : vector<8x256xf32>
    %29 = tpu.transpose %28, [1, 0] : vector<8x256xf32> -> vector<256x8xf32>
    %30 = vector.extract_strided_slice %29 {offsets = [0, 0], sizes = [256, 4], strides = [1, 1]} : vector<256x8xf32> to vector<256x4xf32>
    %c0_24 = arith.constant 0 : index
    %c0_25 = arith.constant 0 : index
    %31 = vector.load %arg10[%c0_24, %c0_25] : memref<256x4xf32, #tpu.memory_space<vmem>>, vector<256x4xf32>
    tpu.vector_store %arg10[%c0_24, %c0_25], %30 {strides = array<i32>} : memref<256x4xf32, #tpu.memory_space<vmem>>, vector<256x4xf32>,
    return
  }
  func.func @transform_0(%arg0: i32) -> (i32, i32) {
    %c0_i32 = arith.constant 0 : i32
    %c0_i32_0 = arith.constant 0 : i32
    return %arg0, %c0_i32 : i32, i32
  }
  func.func @transform_1(%arg0: i32) -> (i32, i32) {
    %c0_i32 = arith.constant 0 : i32
    %c0_i32_0 = arith.constant 0 : i32
    %c0_i32_1 = arith.constant 0 : i32
    return %c0_i32, %c0_i32_0 : i32, i32
  }
  func.func @transform_2(%arg0: i32) -> (i32, i32) {
    %c0_i32 = arith.constant 0 : i32
    %c0_i32_0 = arith.constant 0 : i32
    %c0_i32_1 = arith.constant 0 : i32
    return %c0_i32, %c0_i32_0 : i32, i32
  }
  func.func @transform_3(%arg0: i32) -> (i32, i32) {
    %c0_i32 = arith.constant 0 : i32
    %c0_i32_0 = arith.constant 0 : i32
    %c0_i32_1 = arith.constant 0 : i32
    return %c0_i32, %c0_i32_0 : i32, i32
  }
  func.func @transform_4(%arg0: i32) -> (i32, i32) {
    %c0_i32 = arith.constant 0 : i32
    %c0_i32_0 = arith.constant 0 : i32
    %c0_i32_1 = arith.constant 0 : i32
    return %c0_i32, %c0_i32_0 : i32, i32
  }
  func.func @transform_5(%arg0: i32) -> (i32, i32) {
    %c0_i32 = arith.constant 0 : i32
    %c0_i32_0 = arith.constant 0 : i32
    %c0_i32_1 = arith.constant 0 : i32
    return %c0_i32, %c0_i32_0 : i32, i32
  }
  func.func @transform_6(%arg0: i32) -> (i32, i32) {
    %c0_i32 = arith.constant 0 : i32
    %c0_i32_0 = arith.constant 0 : i32
    %c0_i32_1 = arith.constant 0 : i32
    return %c0_i32, %c0_i32_0 : i32, i32
  }
  func.func @transform_7(%arg0: i32) -> (i32, i32) {
    %c0_i32 = arith.constant 0 : i32
    %c0_i32_0 = arith.constant 0 : i32
    %c0_i32_1 = arith.constant 0 : i32
    return %c0_i32, %c0_i32_0 : i32, i32
  }
  func.func @transform_8(%arg0: i32) -> (i32, i32) {
    %c0_i32 = arith.constant 0 : i32
    %c0_i32_0 = arith.constant 0 : i32
    %c0_i32_1 = arith.constant 0 : i32
    return %c0_i32, %c0_i32_0 : i32, i32
  }
  func.func @transform_9(%arg0: i32) -> (i32, i32) {
    %c0_i32 = arith.constant 0 : i32
    %c0_i32_0 = arith.constant 0 : i32
    return %arg0, %c0_i32 : i32, i32
  }
}

module attributes {stable_mosaic.version = 11 : i64} {
  func.func @_relational_mlp_kernel(%arg0: i32, %arg1: memref<256x6xf32, #tpu.memory_space<vmem>>, %arg2: memref<32x6xf32, #tpu.memory_space<vmem>>, %arg3: memref<32x1xf32, #tpu.memory_space<vmem>>, %arg4: memref<32x32xf32, #tpu.memory_space<vmem>>, %arg5: memref<32x1xf32, #tpu.memory_space<vmem>>, %arg6: memref<32x32xf32, #tpu.memory_space<vmem>>, %arg7: memref<32x1xf32, #tpu.memory_space<vmem>>, %arg8: memref<8x32xf32, #tpu.memory_space<vmem>>, %arg9: memref<8x1xf32, #tpu.memory_space<vmem>>, %arg10: memref<8x256xf32, #tpu.memory_space<vmem>>) attributes {dimension_semantics = [#tpu.dimension_semantics<parallel>], iteration_bounds = array<i64: 1>, scalar_prefetch = 0 : i64, scratch_operands = 0 : i64, tpu.core_type = #tpu.core_type<tc>, window_params = [{transform_indices = @transform_0, window_bounds = array<i64: 256, 6>}, {pipeline_mode = #tpu.pipeline_mode<synchronous>, transform_indices = @transform_1, window_bounds = array<i64: 32, 6>}, {pipeline_mode = #tpu.pipeline_mode<synchronous>, transform_indices = @transform_2, window_bounds = array<i64: 32, 1>}, {pipeline_mode = #tpu.pipeline_mode<synchronous>, transform_indices = @transform_3, window_bounds = array<i64: 32, 32>}, {pipeline_mode = #tpu.pipeline_mode<synchronous>, transform_indices = @transform_4, window_bounds = array<i64: 32, 1>}, {pipeline_mode = #tpu.pipeline_mode<synchronous>, transform_indices = @transform_5, window_bounds = array<i64: 32, 32>}, {pipeline_mode = #tpu.pipeline_mode<synchronous>, transform_indices = @transform_6, window_bounds = array<i64: 32, 1>}, {pipeline_mode = #tpu.pipeline_mode<synchronous>, transform_indices = @transform_7, window_bounds = array<i64: 8, 32>}, {pipeline_mode = #tpu.pipeline_mode<synchronous>, transform_indices = @transform_8, window_bounds = array<i64: 8, 1>}, {transform_indices = @transform_9, window_bounds = array<i64: 8, 256>}]} {
    %c0 = arith.constant 0 : index
    %c0_0 = arith.constant 0 : index
    %0 = vector.load %arg1[%c0, %c0_0] : memref<256x6xf32, #tpu.memory_space<vmem>>, vector<256x6xf32>
    %c0_1 = arith.constant 0 : index
    %c0_2 = arith.constant 0 : index
    %1 = vector.load %arg2[%c0_1, %c0_2] : memref<32x6xf32, #tpu.memory_space<vmem>>, vector<32x6xf32>
    %cst = arith.constant dense<0.000000e+00> : vector<32x256xf32>
    %2 = tpu.matmul %1, %0, %cst {dimension_numbers = #tpu.dot_dimension_numbers<[1], [1], [0], [0], [0, 0, 1, 0], [], []>} : vector<32x6xf32>, vector<256x6xf32>, vector<32x256xf32> -> vector<32x256xf32>
    %c0_3 = arith.constant 0 : index
    %c0_4 = arith.constant 0 : index
    %3 = vector.load %arg3[%c0_3, %c0_4] : memref<32x1xf32, #tpu.memory_space<vmem>>, vector<32x1xf32>
    %4 = vector.broadcast %3 : vector<32x1xf32> to vector<32x256xf32>
    %5 = arith.addf %2, %4 : vector<32x256xf32>
    %cst_5 = arith.constant 0.000000e+00 : f32
    %6 = vector.broadcast %cst_5 : f32 to vector<32x256xf32>
    %7 = arith.maximumf %5, %6 : vector<32x256xf32>
    %c0_6 = arith.constant 0 : index
    %c0_7 = arith.constant 0 : index
    %8 = vector.load %arg4[%c0_6, %c0_7] : memref<32x32xf32, #tpu.memory_space<vmem>>, vector<32x32xf32>
    %cst_8 = arith.constant dense<0.000000e+00> : vector<32x256xf32>
    %9 = tpu.matmul %8, %7, %cst_8 {dimension_numbers = #tpu.dot_dimension_numbers<[1], [0], [0], [1], [0, 0, 1, 1], [], []>} : vector<32x32xf32>, vector<32x256xf32>, vector<32x256xf32> -> vector<32x256xf32>
    %c0_9 = arith.constant 0 : index
    %c0_10 = arith.constant 0 : index
    %10 = vector.load %arg5[%c0_9, %c0_10] : memref<32x1xf32, #tpu.memory_space<vmem>>, vector<32x1xf32>
    %11 = vector.broadcast %10 : vector<32x1xf32> to vector<32x256xf32>
    %12 = arith.addf %9, %11 : vector<32x256xf32>
    %cst_11 = arith.constant 0.000000e+00 : f32
    %13 = vector.broadcast %cst_11 : f32 to vector<32x256xf32>
    %14 = arith.maximumf %12, %13 : vector<32x256xf32>
    %c0_12 = arith.constant 0 : index
    %c0_13 = arith.constant 0 : index
    %15 = vector.load %arg6[%c0_12, %c0_13] : memref<32x32xf32, #tpu.memory_space<vmem>>, vector<32x32xf32>
    %cst_14 = arith.constant dense<0.000000e+00> : vector<32x256xf32>
    %16 = tpu.matmul %15, %14, %cst_14 {dimension_numbers = #tpu.dot_dimension_numbers<[1], [0], [0], [1], [0, 0, 1, 1], [], []>} : vector<32x32xf32>, vector<32x256xf32>, vector<32x256xf32> -> vector<32x256xf32>
    %c0_15 = arith.constant 0 : index
    %c0_16 = arith.constant 0 : index
    %17 = vector.load %arg7[%c0_15, %c0_16] : memref<32x1xf32, #tpu.memory_space<vmem>>, vector<32x1xf32>
    %18 = vector.broadcast %17 : vector<32x1xf32> to vector<32x256xf32>
    %19 = arith.addf %16, %18 : vector<32x256xf32>
    %cst_17 = arith.constant 0.000000e+00 : f32
    %20 = vector.broadcast %cst_17 : f32 to vector<32x256xf32>
    %21 = arith.maximumf %19, %20 : vector<32x256xf32>
    %c0_18 = arith.constant 0 : index
    %c0_19 = arith.constant 0 : index
    %22 = vector.load %arg8[%c0_18, %c0_19] : memref<8x32xf32, #tpu.memory_space<vmem>>, vector<8x32xf32>
    %cst_20 = arith.constant dense<0.000000e+00> : vector<8x256xf32>
    %23 = tpu.matmul %22, %21, %cst_20 {dimension_numbers = #tpu.dot_dimension_numbers<[1], [0], [0], [1], [0, 0, 1, 1], [], []>} : vector<8x32xf32>, vector<32x256xf32>, vector<8x256xf32> -> vector<8x256xf32>
    %c0_21 = arith.constant 0 : index
    %c0_22 = arith.constant 0 : index
    %24 = vector.load %arg9[%c0_21, %c0_22] : memref<8x1xf32, #tpu.memory_space<vmem>>, vector<8x1xf32>
    %25 = vector.broadcast %24 : vector<8x1xf32> to vector<8x256xf32>
    %26 = arith.addf %23, %25 : vector<8x256xf32>
    %cst_23 = arith.constant 0.000000e+00 : f32
    %27 = vector.broadcast %cst_23 : f32 to vector<8x256xf32>
    %28 = arith.maximumf %26, %27 : vector<8x256xf32>
    %c0_24 = arith.constant 0 : index
    %c0_25 = arith.constant 0 : index
    %29 = vector.load %arg10[%c0_24, %c0_25] : memref<8x256xf32, #tpu.memory_space<vmem>>, vector<8x256xf32>
    tpu.vector_store %arg10[%c0_24, %c0_25], %28 {strides = array<i32>} : memref<8x256xf32, #tpu.memory_space<vmem>>, vector<8x256xf32>,
    return
  }
  func.func @transform_0(%arg0: i32) -> (i32, i32) {
    %c0_i32 = arith.constant 0 : i32
    %c0_i32_0 = arith.constant 0 : i32
    return %arg0, %c0_i32 : i32, i32
  }
  func.func @transform_1(%arg0: i32) -> (i32, i32) {
    %c0_i32 = arith.constant 0 : i32
    %c0_i32_0 = arith.constant 0 : i32
    %c0_i32_1 = arith.constant 0 : i32
    return %c0_i32, %c0_i32_0 : i32, i32
  }
  func.func @transform_2(%arg0: i32) -> (i32, i32) {
    %c0_i32 = arith.constant 0 : i32
    %c0_i32_0 = arith.constant 0 : i32
    %c0_i32_1 = arith.constant 0 : i32
    return %c0_i32, %c0_i32_0 : i32, i32
  }
  func.func @transform_3(%arg0: i32) -> (i32, i32) {
    %c0_i32 = arith.constant 0 : i32
    %c0_i32_0 = arith.constant 0 : i32
    %c0_i32_1 = arith.constant 0 : i32
    return %c0_i32, %c0_i32_0 : i32, i32
  }
  func.func @transform_4(%arg0: i32) -> (i32, i32) {
    %c0_i32 = arith.constant 0 : i32
    %c0_i32_0 = arith.constant 0 : i32
    %c0_i32_1 = arith.constant 0 : i32
    return %c0_i32, %c0_i32_0 : i32, i32
  }
  func.func @transform_5(%arg0: i32) -> (i32, i32) {
    %c0_i32 = arith.constant 0 : i32
    %c0_i32_0 = arith.constant 0 : i32
    %c0_i32_1 = arith.constant 0 : i32
    return %c0_i32, %c0_i32_0 : i32, i32
  }
  func.func @transform_6(%arg0: i32) -> (i32, i32) {
    %c0_i32 = arith.constant 0 : i32
    %c0_i32_0 = arith.constant 0 : i32
    %c0_i32_1 = arith.constant 0 : i32
    return %c0_i32, %c0_i32_0 : i32, i32
  }
  func.func @transform_7(%arg0: i32) -> (i32, i32) {
    %c0_i32 = arith.constant 0 : i32
    %c0_i32_0 = arith.constant 0 : i32
    %c0_i32_1 = arith.constant 0 : i32
    return %c0_i32, %c0_i32_0 : i32, i32
  }
  func.func @transform_8(%arg0: i32) -> (i32, i32) {
    %c0_i32 = arith.constant 0 : i32
    %c0_i32_0 = arith.constant 0 : i32
    %c0_i32_1 = arith.constant 0 : i32
    return %c0_i32, %c0_i32_0 : i32, i32
  }
  func.func @transform_9(%arg0: i32) -> (i32, i32) {
    %c0_i32 = arith.constant 0 : i32
    %c0_i32_0 = arith.constant 0 : i32
    return %c0_i32, %arg0 : i32, i32
  }
}

</mosaic_0001>

<llo_original>
// kernel: relational_model.1
$region0: #{relational_model.1}
  #allocation0 [shape = 'u32[]', space=smem, size = 0x4, offset = 0x4, fixed_abs, tag = 'smem constant byte address 0x4 - core index']
  #allocation1 [shape = 'u32[144,128]{1,0:T(1,128)}', space=vmem, size = 0x12000, scoped, tag = 'internal scratch']
  %s0 = inlined_call_operand.vmem [shape: f32[256,6], index: 0, kind: input, shape index: {}]
  %s1 = inlined_call_operand.vmem [shape: f32[32,6], index: 1, kind: input, shape index: {}]
  %s2 = inlined_call_operand.vmem [shape: f32[32,1], index: 2, kind: input, shape index: {}]
  %s3 = inlined_call_operand.vmem [shape: f32[32,32], index: 3, kind: input, shape index: {}]
  %s4 = inlined_call_operand.vmem [shape: f32[32,1], index: 4, kind: input, shape index: {}]
  %s5 = inlined_call_operand.vmem [shape: f32[32,32], index: 5, kind: input, shape index: {}]
  %s6 = inlined_call_operand.vmem [shape: f32[32,1], index: 6, kind: input, shape index: {}]
  %s7 = inlined_call_operand.vmem [shape: f32[8,32], index: 7, kind: input, shape index: {}]
  %s8 = inlined_call_operand.vmem [shape: f32[8,1], index: 8, kind: input, shape index: {}]
  %s9 = inlined_call_operand.vmem [shape: f32[256,4], index: 9, kind: output, shape index: {}]
  %s10 = sld [smem:[#allocation0]]
  $region46: #{relational_model.1} parent=0
    _
  %s12 = ssub.s32 1, %s10
  %s13 = scalar_select 0, %s12, %s10
  // Predicated region
  $region2: #{relational_model.1} parent=0 // pred_check
    _
  $region3: #{relational_model.1} parent=0 // pred_check_branch
    %15 = sbr.rel (0) target = $region5
  $region4: #{relational_model.1} parent=0 // pred_region
    _
  $region5: #{relational_model.1} parent=0 // pred_fallthru
    _
  // Predicated region
  $region6: #{relational_model.1} parent=0 // pred_check
    _
  $region7: #{relational_model.1} parent=0 // pred_check_branch
    %17 = sbr.rel (0) target = $region9
  $region8: #{relational_model.1} parent=0 // pred_region
    _
  $region9: #{relational_model.1} parent=0 // pred_fallthru
    _
  // Predicated region
  $region10: #{relational_model.1} parent=0 // pred_check
    _
  $region11: #{relational_model.1} parent=0 // pred_check_branch
    %19 = sbr.rel (0) target = $region13
  $region12: #{relational_model.1} parent=0 // pred_region
    _
  $region13: #{relational_model.1} parent=0 // pred_fallthru
    _
  // Predicated region
  $region14: #{relational_model.1} parent=0 // pred_check
    _
  $region15: #{relational_model.1} parent=0 // pred_check_branch
    %21 = sbr.rel (0) target = $region17
  $region16: #{relational_model.1} parent=0 // pred_region
    _
  $region17: #{relational_model.1} parent=0 // pred_fallthru
    _
  // Predicated region
  $region18: #{relational_model.1} parent=0 // pred_check
    _
  $region19: #{relational_model.1} parent=0 // pred_check_branch
    %23 = sbr.rel (0) target = $region21
  $region20: #{relational_model.1} parent=0 // pred_region
    _
  $region21: #{relational_model.1} parent=0 // pred_fallthru
    _
  // Predicated region
  $region22: #{relational_model.1} parent=0 // pred_check
    _
  $region23: #{relational_model.1} parent=0 // pred_check_branch
    %25 = sbr.rel (0) target = $region25
  $region24: #{relational_model.1} parent=0 // pred_region
    _
  $region25: #{relational_model.1} parent=0 // pred_fallthru
    _
  // Predicated region
  $region26: #{relational_model.1} parent=0 // pred_check
    _
  $region27: #{relational_model.1} parent=0 // pred_check_branch
    %27 = sbr.rel (0) target = $region29
  $region28: #{relational_model.1} parent=0 // pred_region
    _
  $region29: #{relational_model.1} parent=0 // pred_fallthru
    _
  // Predicated region
  $region30: #{relational_model.1} parent=0 // pred_check
    _
  $region31: #{relational_model.1} parent=0 // pred_check_branch
    %29 = sbr.rel (0) target = $region33
  $region32: #{relational_model.1} parent=0 // pred_region
    _
  $region33: #{relational_model.1} parent=0 // pred_fallthru
    _
  // Predicated region
  $region34: #{relational_model.1} parent=0 // pred_check
    _
  $region35: #{relational_model.1} parent=0 // pred_check_branch
    %31 = sbr.rel (0) target = $region37
  $region36: #{relational_model.1} parent=0 // pred_region
    _
  $region37: #{relational_model.1} parent=0 // pred_fallthru
    _
  %v32 = vld [vmem:[%s0] sm:$0xff]
  %v33 = vld [vmem:[%s0 + $0x8] sm:$0xff]
  %v34 = vld [vmem:[%s0 + $0x10] sm:$0xff]
  %v35 = vld [vmem:[%s0 + $0x18] sm:$0xff]
  %v36 = vld [vmem:[%s0 + $0x20] sm:$0xff]
  %v37 = vld [vmem:[%s0 + $0x28] sm:$0xff]
  %v38 = vld [vmem:[%s0 + $0x30] sm:$0xff]
  %v39 = vld [vmem:[%s0 + $0x38] sm:$0xff]
  %v40 = vld [vmem:[%s0 + $0x40] sm:$0xff]
  %v41 = vld [vmem:[%s0 + $0x48] sm:$0xff]
  %v42 = vld [vmem:[%s0 + $0x50] sm:$0xff]
  %v43 = vld [vmem:[%s0 + $0x58] sm:$0xff]
  %v44 = vld [vmem:[%s0 + $0x60] sm:$0xff]
  %v45 = vld [vmem:[%s0 + $0x68] sm:$0xff]
  %v46 = vld [vmem:[%s0 + $0x70] sm:$0xff]
  %v47 = vld [vmem:[%s0 + $0x78] sm:$0xff]
  %v48 = vld [vmem:[%s0 + $0x80] sm:$0xff]
  %v49 = vld [vmem:[%s0 + $0x88] sm:$0xff]
  %v50 = vld [vmem:[%s0 + $0x90] sm:$0xff]
  %v51 = vld [vmem:[%s0 + $0x98] sm:$0xff]
  %v52 = vld [vmem:[%s0 + $0xa0] sm:$0xff]
  %v53 = vld [vmem:[%s0 + $0xa8] sm:$0xff]
  %v54 = vld [vmem:[%s0 + $0xb0] sm:$0xff]
  %v55 = vld [vmem:[%s0 + $0xb8] sm:$0xff]
  %v56 = vld [vmem:[%s0 + $0xc0] sm:$0xff]
  %v57 = vld [vmem:[%s0 + $0xc8] sm:$0xff]
  %v58 = vld [vmem:[%s0 + $0xd0] sm:$0xff]
  %v59 = vld [vmem:[%s0 + $0xd8] sm:$0xff]
  %v60 = vld [vmem:[%s0 + $0xe0] sm:$0xff]
  %v61 = vld [vmem:[%s0 + $0xe8] sm:$0xff]
  %v62 = vld [vmem:[%s0 + $0xf0] sm:$0xff]
  %v63 = vld [vmem:[%s0 + $0xf8] sm:$0xff]
  %v64 = vld [vmem:[%s1] sm:$0xff]
  %v65 = vld [vmem:[%s1 + $0x8] sm:$0xff]
  %v66 = vld [vmem:[%s1 + $0x10] sm:$0xff]
  %v67 = vld [vmem:[%s1 + $0x18] sm:$0xff]
  %v68 = vld [vmem:[%s2] sm:$0xff]
  %v69 = vld [vmem:[%s2 + $0x8] sm:$0xff]
  %v70 = vld [vmem:[%s2 + $0x10] sm:$0xff]
  %v71 = vld [vmem:[%s2 + $0x18] sm:$0xff]
  %73 = vset.pattern.permute.xlu0 0
  %74 = vperm.xlu0 %73, %v68
  %v75 = vpop.permute.xlu0 %74
  %78 = vset.pattern.permute.xlu0 0
  %79 = vperm.xlu0 %78, %v69
  %v80 = vpop.permute.xlu0 %79
  %83 = vset.pattern.permute.xlu0 0
  %84 = vperm.xlu0 %83, %v70
  %v85 = vpop.permute.xlu0 %84
  %88 = vset.pattern.permute.xlu0 0
  %89 = vperm.xlu0 %88, %v71
  %v90 = vpop.permute.xlu0 %89
  %vm92 = vcmask 48128
  %v94 = vsel %vm92, %v64, 0
  %v97 = vsel %vm92, %v65, 0
  %v100 = vsel %vm92, %v66, 0
  %v103 = vsel %vm92, %v67, 0
  %v106 = vsel %vm92, %v32, 0
  %v109 = vsel %vm92, %v33, 0
  %v112 = vsel %vm92, %v34, 0
  %v115 = vsel %vm92, %v35, 0
  %v118 = vsel %vm92, %v36, 0
  %v121 = vsel %vm92, %v37, 0
  %v124 = vsel %vm92, %v38, 0
  %v127 = vsel %vm92, %v39, 0
  %v130 = vsel %vm92, %v40, 0
  %v133 = vsel %vm92, %v41, 0
  %v136 = vsel %vm92, %v42, 0
  %v139 = vsel %vm92, %v43, 0
  %v142 = vsel %vm92, %v44, 0
  %v145 = vsel %vm92, %v45, 0
  %v148 = vsel %vm92, %v46, 0
  %v151 = vsel %vm92, %v47, 0
  %v154 = vsel %vm92, %v48, 0
  %v157 = vsel %vm92, %v49, 0
  %v160 = vsel %vm92, %v50, 0
  %v163 = vsel %vm92, %v51, 0
  %v166 = vsel %vm92, %v52, 0
  %v169 = vsel %vm92, %v53, 0
  %v172 = vsel %vm92, %v54, 0
  %v175 = vsel %vm92, %v55, 0
  %v178 = vsel %vm92, %v56, 0
  %v181 = vsel %vm92, %v57, 0
  %v184 = vsel %vm92, %v58, 0
  %v187 = vsel %vm92, %v59, 0
  %v190 = vsel %vm92, %v60, 0
  %v193 = vsel %vm92, %v61, 0
  %v196 = vsel %vm92, %v62, 0
  %v199 = vsel %vm92, %v63, 0
  %201 = vmatprep.subr.mxu0 0.0
  %202 = vmatpush1.xpose.msra.mxu0 %v106
  %203 = vmatprep.subr.mxu0 0.0
  %204 = vmatpush1.xpose.msra.mxu0 %v109
  %205 = vmatprep.subr.mxu0 0.0
  %206 = vmatpush1.xpose.msra.mxu0 %v112
  %207 = vmatprep.subr.mxu0 0.0
  %208 = vmatpush1.xpose.msra.mxu0 %v115
  %209 = vmatprep.subr.mxu0 0.0
  %210 = vmatpush1.xpose.msra.mxu0 %v118
  %211 = vmatprep.subr.mxu0 0.0
  %212 = vmatpush1.xpose.msra.mxu0 %v121
  %213 = vmatprep.subr.mxu0 0.0
  %214 = vmatpush1.xpose.msra.mxu0 %v124
  %215 = vmatprep.subr.mxu0 0.0
  %216 = vmatpush1.xpose.msra.mxu0 %v127
  %217 = vmatprep.subr.mxu0 0.0
  %218 = vmatpush1.xpose.msra.mxu0 %v130
  %219 = vmatprep.subr.mxu0 0.0
  %220 = vmatpush1.xpose.msra.mxu0 %v133
  %221 = vmatprep.subr.mxu0 0.0
  %222 = vmatpush1.xpose.msra.mxu0 %v136
  %223 = vmatprep.subr.mxu0 0.0
  %224 = vmatpush1.xpose.msra.mxu0 %v139
  %225 = vmatprep.subr.mxu0 0.0
  %226 = vmatpush1.xpose.msra.mxu0 %v142
  %227 = vmatprep.subr.mxu0 0.0
  %228 = vmatpush1.xpose.msra.mxu0 %v145
  %229 = vmatprep.subr.mxu0 0.0
  %230 = vmatpush1.xpose.msra.mxu0 %v148
  %231 = vmatprep.subr.mxu0 0.0
  %232 = vmatpush1.xpose.msra.mxu0 %v151
  %233 = vmatprep.subr.mxu0 0.0
  %234 = vmatpush1.xpose.msra.mxu0 %v154
  %235 = vmatprep.subr.mxu0 0.0
  %236 = vmatpush1.xpose.msra.mxu0 %v157
  %237 = vmatprep.subr.mxu0 0.0
  %238 = vmatpush1.xpose.msra.mxu0 %v160
  %239 = vmatprep.subr.mxu0 0.0
  %240 = vmatpush1.xpose.msra.mxu0 %v163
  %241 = vmatprep.subr.mxu0 0.0
  %242 = vmatpush1.xpose.msra.mxu0 %v166
  %243 = vmatprep.subr.mxu0 0.0
  %244 = vmatpush1.xpose.msra.mxu0 %v169
  %245 = vmatprep.subr.mxu0 0.0
  %246 = vmatpush1.xpose.msra.mxu0 %v172
  %247 = vmatprep.subr.mxu0 0.0
  %248 = vmatpush1.xpose.msra.mxu0 %v175
  %249 = vmatprep.subr.mxu0 0.0
  %250 = vmatpush1.xpose.msra.mxu0 %v178
  %251 = vmatprep.subr.mxu0 0.0
  %252 = vmatpush1.xpose.msra.mxu0 %v181
  %253 = vmatprep.subr.mxu0 0.0
  %254 = vmatpush1.xpose.msra.mxu0 %v184
  %255 = vmatprep.subr.mxu0 0.0
  %256 = vmatpush1.xpose.msra.mxu0 %v187
  %257 = vmatprep.subr.mxu0 0.0
  %258 = vmatpush1.xpose.msra.mxu0 %v190
  %259 = vmatprep.subr.mxu0 0.0
  %260 = vmatpush1.xpose.msra.mxu0 %v193
  %261 = vmatprep.subr.mxu0 0.0
  %262 = vmatpush1.xpose.msra.mxu0 %v196
  %263 = vmatprep.subr.mxu0 0.0
  %264 = vmatpush1.xpose.msra.mxu0 %v199
  %265 = vmatprep.mubr.f32.mxu0 0.0
  %266 = vmatmul.mubr.f32.gmra.mrb[0].mxu0 %v94
  %v267 = vpop.f32.mrb[0].mxu0
  %v268 = vadd.f32 %v75, %v267
  %v269 = vpop.f32.mrb[0].mxu0
  %v270 = vadd.f32 %v75, %v269
  %271 = vmatprep.mubr.f32.mxu0 0.0
  %272 = vmatmul.mubr.f32.gmra.mrb[0].mxu0 %v97
  %v273 = vpop.f32.mrb[0].mxu0
  %v274 = vadd.f32 %v80, %v273
  %v275 = vpop.f32.mrb[0].mxu0
  %v276 = vadd.f32 %v80, %v275
  %277 = vmatprep.mubr.f32.mxu0 0.0
  %278 = vmatmul.mubr.f32.gmra.mrb[0].mxu0 %v100
  %v279 = vpop.f32.mrb[0].mxu0
  %v280 = vadd.f32 %v85, %v279
  %v281 = vpop.f32.mrb[0].mxu0
  %v282 = vadd.f32 %v85, %v281
  %283 = vmatprep.mubr.f32.mxu0 0.0
  %284 = vmatmul.mubr.f32.gmra.mrb[0].mxu0 %v103
  %v285 = vpop.f32.mrb[0].mxu0
  %v286 = vadd.f32 %v90, %v285
  %v287 = vpop.f32.mrb[0].mxu0
  %v288 = vadd.f32 %v90, %v287
  %289 = vdwg.mxu0
  %v290 = vmax.f32 %v268, 0.0
  %v291 = vmax.f32 %v270, 0.0
  %v292 = vmax.f32 %v274, 0.0
  %v293 = vmax.f32 %v276, 0.0
  %v294 = vmax.f32 %v280, 0.0
  %v295 = vmax.f32 %v282, 0.0
  %v296 = vmax.f32 %v286, 0.0
  %v297 = vmax.f32 %v288, 0.0
  %v298 = vld [vmem:[%s3] sm:$0xff]
  %v299 = vld [vmem:[%s3 + $0x8] sm:$0xff]
  %v300 = vld [vmem:[%s3 + $0x10] sm:$0xff]
  %v301 = vld [vmem:[%s3 + $0x18] sm:$0xff]
  %v302 = vld [vmem:[%s4] sm:$0xff]
  %v303 = vld [vmem:[%s4 + $0x8] sm:$0xff]
  %v304 = vld [vmem:[%s4 + $0x10] sm:$0xff]
  %v305 = vld [vmem:[%s4 + $0x18] sm:$0xff]
  %307 = vset.pattern.permute.xlu0 0
  %308 = vperm.xlu0 %307, %v302
  %v309 = vpop.permute.xlu0 %308
  %312 = vset.pattern.permute.xlu0 0
  %313 = vperm.xlu0 %312, %v303
  %v314 = vpop.permute.xlu0 %313
  %317 = vset.pattern.permute.xlu0 0
  %318 = vperm.xlu0 %317, %v304
  %v319 = vpop.permute.xlu0 %318
  %322 = vset.pattern.permute.xlu0 0
  %323 = vperm.xlu0 %322, %v305
  %v324 = vpop.permute.xlu0 %323
  %vm326 = vcmask 261120
  %v328 = vsel %vm326, %v298, 0
  %v331 = vsel %vm326, %v299, 0
  %v334 = vsel %vm326, %v300, 0
  %v337 = vsel %vm326, %v301, 0
  %339 = vmatprep.subr.mxu0 %v291
  %340 = vmatpush1.msra.mxu0 %v290
  %341 = vmatprep.subr.mxu0 %v293
  %342 = vmatpush1.msra.mxu0 %v292
  %343 = vmatprep.subr.mxu0 %v295
  %344 = vmatpush1.msra.mxu0 %v294
  %345 = vmatprep.subr.mxu0 %v297
  %346 = vmatpush1.msra.mxu0 %v296
  %347 = vmatprep.subr.mxu0 0.0
  %348 = vmatpush1.msra.mxu0 0.0
  %349 = vmatprep.subr.mxu0 0.0
  %350 = vmatpush1.msra.mxu0 0.0
  %351 = vmatprep.subr.mxu0 0.0
  %352 = vmatpush1.msra.mxu0 0.0
  %353 = vmatprep.subr.mxu0 0.0
  %354 = vmatpush1.msra.mxu0 0.0
  %355 = vmatprep.subr.mxu0 0.0
  %356 = vmatpush1.msra.mxu0 0.0
  %357 = vmatprep.subr.mxu0 0.0
  %358 = vmatpush1.msra.mxu0 0.0
  %359 = vmatprep.subr.mxu0 0.0
  %360 = vmatpush1.msra.mxu0 0.0
  %361 = vmatprep.subr.mxu0 0.0
  %362 = vmatpush1.msra.mxu0 0.0
  %363 = vmatprep.subr.mxu0 0.0
  %364 = vmatpush1.msra.mxu0 0.0
  %365 = vmatprep.subr.mxu0 0.0
  %366 = vmatpush1.msra.mxu0 0.0
  %367 = vmatprep.subr.mxu0 0.0
  %368 = vmatpush1.msra.mxu0 0.0
  %369 = vmatprep.subr.mxu0 0.0
  %370 = vmatpush1.msra.mxu0 0.0
  %371 = vmatprep.subr.mxu0 0.0
  %372 = vmatpush1.msra.mxu0 0.0
  %373 = vmatprep.subr.mxu0 0.0
  %374 = vmatpush1.msra.mxu0 0.0
  %375 = vmatprep.subr.mxu0 0.0
  %376 = vmatpush1.msra.mxu0 0.0
  %377 = vmatprep.subr.mxu0 0.0
  %378 = vmatpush1.msra.mxu0 0.0
  %379 = vmatprep.subr.mxu0 0.0
  %380 = vmatpush1.msra.mxu0 0.0
  %381 = vmatprep.subr.mxu0 0.0
  %382 = vmatpush1.msra.mxu0 0.0
  %383 = vmatprep.subr.mxu0 0.0
  %384 = vmatpush1.msra.mxu0 0.0
  %385 = vmatprep.subr.mxu0 0.0
  %386 = vmatpush1.msra.mxu0 0.0
  %387 = vmatprep.subr.mxu0 0.0
  %388 = vmatpush1.msra.mxu0 0.0
  %389 = vmatprep.subr.mxu0 0.0
  %390 = vmatpush1.msra.mxu0 0.0
  %391 = vmatprep.subr.mxu0 0.0
  %392 = vmatpush1.msra.mxu0 0.0
  %393 = vmatprep.subr.mxu0 0.0
  %394 = vmatpush1.msra.mxu0 0.0
  %395 = vmatprep.subr.mxu0 0.0
  %396 = vmatpush1.msra.mxu0 0.0
  %397 = vmatprep.subr.mxu0 0.0
  %398 = vmatpush1.msra.mxu0 0.0
  %399 = vmatprep.subr.mxu0 0.0
  %400 = vmatpush1.msra.mxu0 0.0
  %401 = vmatprep.subr.mxu0 0.0
  %402 = vmatpush1.msra.mxu0 0.0
  %403 = vmatprep.mubr.f32.mxu0 0.0
  %404 = vmatmul.mubr.f32.gmra.mrb[0].mxu0 %v328
  %v405 = vpop.f32.mrb[0].mxu0
  %v406 = vadd.f32 %v309, %v405
  %v407 = vpop.f32.mrb[0].mxu0
  %v408 = vadd.f32 %v309, %v407
  %409 = vmatprep.mubr.f32.mxu0 0.0
  %410 = vmatmul.mubr.f32.gmra.mrb[0].mxu0 %v331
  %v411 = vpop.f32.mrb[0].mxu0
  %v412 = vadd.f32 %v314, %v411
  %v413 = vpop.f32.mrb[0].mxu0
  %v414 = vadd.f32 %v314, %v413
  %415 = vmatprep.mubr.f32.mxu0 0.0
  %416 = vmatmul.mubr.f32.gmra.mrb[0].mxu0 %v334
  %v417 = vpop.f32.mrb[0].mxu0
  %v418 = vadd.f32 %v319, %v417
  %v419 = vpop.f32.mrb[0].mxu0
  %v420 = vadd.f32 %v319, %v419
  %421 = vmatprep.mubr.f32.mxu0 0.0
  %422 = vmatmul.mubr.f32.gmra.mrb[0].mxu0 %v337
  %v423 = vpop.f32.mrb[0].mxu0
  %v424 = vadd.f32 %v324, %v423
  %v425 = vpop.f32.mrb[0].mxu0
  %v426 = vadd.f32 %v324, %v425
  %427 = vdwg.mxu0
  %v428 = vmax.f32 %v406, 0.0
  %v429 = vmax.f32 %v408, 0.0
  %v430 = vmax.f32 %v412, 0.0
  %v431 = vmax.f32 %v414, 0.0
  %v432 = vmax.f32 %v418, 0.0
  %v433 = vmax.f32 %v420, 0.0
  %v434 = vmax.f32 %v424, 0.0
  %v435 = vmax.f32 %v426, 0.0
  %v436 = vld [vmem:[%s5] sm:$0xff]
  %v437 = vld [vmem:[%s5 + $0x8] sm:$0xff]
  %v438 = vld [vmem:[%s5 + $0x10] sm:$0xff]
  %v439 = vld [vmem:[%s5 + $0x18] sm:$0xff]
  %v440 = vld [vmem:[%s6] sm:$0xff]
  %v441 = vld [vmem:[%s6 + $0x8] sm:$0xff]
  %v442 = vld [vmem:[%s6 + $0x10] sm:$0xff]
  %v443 = vld [vmem:[%s6 + $0x18] sm:$0xff]
  %445 = vset.pattern.permute.xlu0 0
  %446 = vperm.xlu0 %445, %v440
  %v447 = vpop.permute.xlu0 %446
  %450 = vset.pattern.permute.xlu0 0
  %451 = vperm.xlu0 %450, %v441
  %v452 = vpop.permute.xlu0 %451
  %455 = vset.pattern.permute.xlu0 0
  %456 = vperm.xlu0 %455, %v442
  %v457 = vpop.permute.xlu0 %456
  %460 = vset.pattern.permute.xlu0 0
  %461 = vperm.xlu0 %460, %v443
  %v462 = vpop.permute.xlu0 %461
  %v465 = vsel %vm326, %v436, 0
  %v468 = vsel %vm326, %v437, 0
  %v471 = vsel %vm326, %v438, 0
  %v474 = vsel %vm326, %v439, 0
  %476 = vmatprep.subr.mxu0 %v429
  %477 = vmatpush1.msra.mxu0 %v428
  %478 = vmatprep.subr.mxu0 %v431
  %479 = vmatpush1.msra.mxu0 %v430
  %480 = vmatprep.subr.mxu0 %v433
  %481 = vmatpush1.msra.mxu0 %v432
  %482 = vmatprep.subr.mxu0 %v435
  %483 = vmatpush1.msra.mxu0 %v434
  %484 = vmatprep.subr.mxu0 0.0
  %485 = vmatpush1.msra.mxu0 0.0
  %486 = vmatprep.subr.mxu0 0.0
  %487 = vmatpush1.msra.mxu0 0.0
  %488 = vmatprep.subr.mxu0 0.0
  %489 = vmatpush1.msra.mxu0 0.0
  %490 = vmatprep.subr.mxu0 0.0
  %491 = vmatpush1.msra.mxu0 0.0
  %492 = vmatprep.subr.mxu0 0.0
  %493 = vmatpush1.msra.mxu0 0.0
  %494 = vmatprep.subr.mxu0 0.0
  %495 = vmatpush1.msra.mxu0 0.0
  %496 = vmatprep.subr.mxu0 0.0
  %497 = vmatpush1.msra.mxu0 0.0
  %498 = vmatprep.subr.mxu0 0.0
  %499 = vmatpush1.msra.mxu0 0.0
  %500 = vmatprep.subr.mxu0 0.0
  %501 = vmatpush1.msra.mxu0 0.0
  %502 = vmatprep.subr.mxu0 0.0
  %503 = vmatpush1.msra.mxu0 0.0
  %504 = vmatprep.subr.mxu0 0.0
  %505 = vmatpush1.msra.mxu0 0.0
  %506 = vmatprep.subr.mxu0 0.0
  %507 = vmatpush1.msra.mxu0 0.0
  %508 = vmatprep.subr.mxu0 0.0
  %509 = vmatpush1.msra.mxu0 0.0
  %510 = vmatprep.subr.mxu0 0.0
  %511 = vmatpush1.msra.mxu0 0.0
  %512 = vmatprep.subr.mxu0 0.0
  %513 = vmatpush1.msra.mxu0 0.0
  %514 = vmatprep.subr.mxu0 0.0
  %515 = vmatpush1.msra.mxu0 0.0
  %516 = vmatprep.subr.mxu0 0.0
  %517 = vmatpush1.msra.mxu0 0.0
  %518 = vmatprep.subr.mxu0 0.0
  %519 = vmatpush1.msra.mxu0 0.0
  %520 = vmatprep.subr.mxu0 0.0
  %521 = vmatpush1.msra.mxu0 0.0
  %522 = vmatprep.subr.mxu0 0.0
  %523 = vmatpush1.msra.mxu0 0.0
  %524 = vmatprep.subr.mxu0 0.0
  %525 = vmatpush1.msra.mxu0 0.0
  %526 = vmatprep.subr.mxu0 0.0
  %527 = vmatpush1.msra.mxu0 0.0
  %528 = vmatprep.subr.mxu0 0.0
  %529 = vmatpush1.msra.mxu0 0.0
  %530 = vmatprep.subr.mxu0 0.0
  %531 = vmatpush1.msra.mxu0 0.0
  %532 = vmatprep.subr.mxu0 0.0
  %533 = vmatpush1.msra.mxu0 0.0
  %534 = vmatprep.subr.mxu0 0.0
  %535 = vmatpush1.msra.mxu0 0.0
  %536 = vmatprep.subr.mxu0 0.0
  %537 = vmatpush1.msra.mxu0 0.0
  %538 = vmatprep.subr.mxu0 0.0
  %539 = vmatpush1.msra.mxu0 0.0
  %540 = vmatprep.mubr.f32.mxu0 0.0
  %541 = vmatmul.mubr.f32.gmra.mrb[0].mxu0 %v465
  %v542 = vpop.f32.mrb[0].mxu0
  %v543 = vadd.f32 %v447, %v542
  %v544 = vpop.f32.mrb[0].mxu0
  %v545 = vadd.f32 %v447, %v544
  %546 = vmatprep.mubr.f32.mxu0 0.0
  %547 = vmatmul.mubr.f32.gmra.mrb[0].mxu0 %v468
  %v548 = vpop.f32.mrb[0].mxu0
  %v549 = vadd.f32 %v452, %v548
  %v550 = vpop.f32.mrb[0].mxu0
  %v551 = vadd.f32 %v452, %v550
  %552 = vmatprep.mubr.f32.mxu0 0.0
  %553 = vmatmul.mubr.f32.gmra.mrb[0].mxu0 %v471
  %v554 = vpop.f32.mrb[0].mxu0
  %v555 = vadd.f32 %v457, %v554
  %v556 = vpop.f32.mrb[0].mxu0
  %v557 = vadd.f32 %v457, %v556
  %558 = vmatprep.mubr.f32.mxu0 0.0
  %559 = vmatmul.mubr.f32.gmra.mrb[0].mxu0 %v474
  %v560 = vpop.f32.mrb[0].mxu0
  %v561 = vadd.f32 %v462, %v560
  %v562 = vpop.f32.mrb[0].mxu0
  %v563 = vadd.f32 %v462, %v562
  %564 = vdwg.mxu0
  %v565 = vmax.f32 %v543, 0.0
  %v566 = vmax.f32 %v545, 0.0
  %v567 = vmax.f32 %v549, 0.0
  %v568 = vmax.f32 %v551, 0.0
  %v569 = vmax.f32 %v555, 0.0
  %v570 = vmax.f32 %v557, 0.0
  %v571 = vmax.f32 %v561, 0.0
  %v572 = vmax.f32 %v563, 0.0
  %v573 = vld [vmem:[%s7] sm:$0xff]
  %v574 = vld [vmem:[%s8] sm:$0xff]
  %576 = vset.pattern.permute.xlu0 0
  %577 = vperm.xlu0 %576, %v574
  %v578 = vpop.permute.xlu0 %577
  %v581 = vsel %vm326, %v573, 0
  %583 = vmatprep.subr.mxu0 %v566
  %584 = vmatpush1.msra.mxu0 %v565
  %585 = vmatprep.subr.mxu0 %v568
  %586 = vmatpush1.msra.mxu0 %v567
  %587 = vmatprep.subr.mxu0 %v570
  %588 = vmatpush1.msra.mxu0 %v569
  %589 = vmatprep.subr.mxu0 %v572
  %590 = vmatpush1.msra.mxu0 %v571
  %591 = vmatprep.subr.mxu0 0.0
  %592 = vmatpush1.msra.mxu0 0.0
  %593 = vmatprep.subr.mxu0 0.0
  %594 = vmatpush1.msra.mxu0 0.0
  %595 = vmatprep.subr.mxu0 0.0
  %596 = vmatpush1.msra.mxu0 0.0
  %597 = vmatprep.subr.mxu0 0.0
  %598 = vmatpush1.msra.mxu0 0.0
  %599 = vmatprep.subr.mxu0 0.0
  %600 = vmatpush1.msra.mxu0 0.0
  %601 = vmatprep.subr.mxu0 0.0
  %602 = vmatpush1.msra.mxu0 0.0
  %603 = vmatprep.subr.mxu0 0.0
  %604 = vmatpush1.msra.mxu0 0.0
  %605 = vmatprep.subr.mxu0 0.0
  %606 = vmatpush1.msra.mxu0 0.0
  %607 = vmatprep.subr.mxu0 0.0
  %608 = vmatpush1.msra.mxu0 0.0
  %609 = vmatprep.subr.mxu0 0.0
  %610 = vmatpush1.msra.mxu0 0.0
  %611 = vmatprep.subr.mxu0 0.0
  %612 = vmatpush1.msra.mxu0 0.0
  %613 = vmatprep.subr.mxu0 0.0
  %614 = vmatpush1.msra.mxu0 0.0
  %615 = vmatprep.subr.mxu0 0.0
  %616 = vmatpush1.msra.mxu0 0.0
  %617 = vmatprep.subr.mxu0 0.0
  %618 = vmatpush1.msra.mxu0 0.0
  %619 = vmatprep.subr.mxu0 0.0
  %620 = vmatpush1.msra.mxu0 0.0
  %621 = vmatprep.subr.mxu0 0.0
  %622 = vmatpush1.msra.mxu0 0.0
  %623 = vmatprep.subr.mxu0 0.0
  %624 = vmatpush1.msra.mxu0 0.0
  %625 = vmatprep.subr.mxu0 0.0
  %626 = vmatpush1.msra.mxu0 0.0
  %627 = vmatprep.subr.mxu0 0.0
  %628 = vmatpush1.msra.mxu0 0.0
  %629 = vmatprep.subr.mxu0 0.0
  %630 = vmatpush1.msra.mxu0 0.0
  %631 = vmatprep.subr.mxu0 0.0
  %632 = vmatpush1.msra.mxu0 0.0
  %633 = vmatprep.subr.mxu0 0.0
  %634 = vmatpush1.msra.mxu0 0.0
  %635 = vmatprep.subr.mxu0 0.0
  %636 = vmatpush1.msra.mxu0 0.0
  %637 = vmatprep.subr.mxu0 0.0
  %638 = vmatpush1.msra.mxu0 0.0
  %639 = vmatprep.subr.mxu0 0.0
  %640 = vmatpush1.msra.mxu0 0.0
  %641 = vmatprep.subr.mxu0 0.0
  %642 = vmatpush1.msra.mxu0 0.0
  %643 = vmatprep.subr.mxu0 0.0
  %644 = vmatpush1.msra.mxu0 0.0
  %645 = vmatprep.subr.mxu0 0.0
  %646 = vmatpush1.msra.mxu0 0.0
  %647 = vmatprep.mubr.f32.mxu0 0.0
  %648 = vmatmul.mubr.f32.gmra.mrb[0].mxu0 %v581
  %v649 = vpop.f32.mrb[0].mxu0
  %v650 = vadd.f32 %v578, %v649
  %v651 = vpop.f32.mrb[0].mxu0
  %v652 = vadd.f32 %v578, %v651
  %653 = vdwg.mxu0
  %v654 = vmax.f32 %v650, 0.0
  %v655 = vmax.f32 %v652, 0.0
  %656 = vxpose.xlu0.b32.start [1/16] %v654, 128
  %657 = vxpose.xlu0.b32.cont [2/16] 0.0, 128
  %658 = vxpose.xlu0.b32.cont [3/16] 0.0, 128
  %659 = vxpose.xlu0.b32.cont [4/16] 0.0, 128
  %660 = vxpose.xlu0.b32.cont [5/16] 0.0, 128
  %661 = vxpose.xlu0.b32.cont [6/16] 0.0, 128
  %662 = vxpose.xlu0.b32.cont [7/16] 0.0, 128
  %663 = vxpose.xlu0.b32.cont [8/16] 0.0, 128
  %664 = vxpose.xlu0.b32.cont [9/16] 0.0, 128
  %665 = vxpose.xlu0.b32.cont [10/16] 0.0, 128
  %666 = vxpose.xlu0.b32.cont [11/16] 0.0, 128
  %667 = vxpose.xlu0.b32.cont [12/16] 0.0, 128
  %668 = vxpose.xlu0.b32.cont [13/16] 0.0, 128
  %669 = vxpose.xlu0.b32.cont [14/16] 0.0, 128
  %670 = vxpose.xlu0.b32.cont [15/16] 0.0, 128
  %671 = vxpose.xlu0.b32.end [16/16] 0.0, 128
  %v672 = vpop.trf.xlu0
  %v673 = vpop.trf.xlu0
  %v674 = vpop.trf.xlu0
  %v675 = vpop.trf.xlu0
  %v676 = vpop.trf.xlu0
  %v677 = vpop.trf.xlu0
  %v678 = vpop.trf.xlu0
  %v679 = vpop.trf.xlu0
  %v680 = vpop.trf.xlu0
  %v681 = vpop.trf.xlu0
  %v682 = vpop.trf.xlu0
  %v683 = vpop.trf.xlu0
  %v684 = vpop.trf.xlu0
  %v685 = vpop.trf.xlu0
  %v686 = vpop.trf.xlu0
  %v687 = vpop.trf.xlu0
  %688 = vxpose.xlu0.b32.start [1/16] %v655, 128
  %689 = vxpose.xlu0.b32.cont [2/16] 0.0, 128
  %690 = vxpose.xlu0.b32.cont [3/16] 0.0, 128
  %691 = vxpose.xlu0.b32.cont [4/16] 0.0, 128
  %692 = vxpose.xlu0.b32.cont [5/16] 0.0, 128
  %693 = vxpose.xlu0.b32.cont [6/16] 0.0, 128
  %694 = vxpose.xlu0.b32.cont [7/16] 0.0, 128
  %695 = vxpose.xlu0.b32.cont [8/16] 0.0, 128
  %696 = vxpose.xlu0.b32.cont [9/16] 0.0, 128
  %697 = vxpose.xlu0.b32.cont [10/16] 0.0, 128
  %698 = vxpose.xlu0.b32.cont [11/16] 0.0, 128
  %699 = vxpose.xlu0.b32.cont [12/16] 0.0, 128
  %700 = vxpose.xlu0.b32.cont [13/16] 0.0, 128
  %701 = vxpose.xlu0.b32.cont [14/16] 0.0, 128
  %702 = vxpose.xlu0.b32.cont [15/16] 0.0, 128
  %703 = vxpose.xlu0.b32.end [16/16] 0.0, 128
  %v704 = vpop.trf.xlu0
  %v705 = vpop.trf.xlu0
  %v706 = vpop.trf.xlu0
  %v707 = vpop.trf.xlu0
  %v708 = vpop.trf.xlu0
  %v709 = vpop.trf.xlu0
  %v710 = vpop.trf.xlu0
  %v711 = vpop.trf.xlu0
  %v712 = vpop.trf.xlu0
  %v713 = vpop.trf.xlu0
  %v714 = vpop.trf.xlu0
  %v715 = vpop.trf.xlu0
  %v716 = vpop.trf.xlu0
  %v717 = vpop.trf.xlu0
  %v718 = vpop.trf.xlu0
  %v719 = vpop.trf.xlu0
  %vm720 = vcmask 31744
  %721 = vst.msk [vmem:[%s9] sm:$0xff] %vm720, %v672
  %722 = vst.msk [vmem:[%s9 + $0x8] sm:$0xff] %vm720, %v673
  %723 = vst.msk [vmem:[%s9 + $0x10] sm:$0xff] %vm720, %v674
  %724 = vst.msk [vmem:[%s9 + $0x18] sm:$0xff] %vm720, %v675
  %725 = vst.msk [vmem:[%s9 + $0x20] sm:$0xff] %vm720, %v676
  %726 = vst.msk [vmem:[%s9 + $0x28] sm:$0xff] %vm720, %v677
  %727 = vst.msk [vmem:[%s9 + $0x30] sm:$0xff] %vm720, %v678
  %728 = vst.msk [vmem:[%s9 + $0x38] sm:$0xff] %vm720, %v679
  %729 = vst.msk [vmem:[%s9 + $0x40] sm:$0xff] %vm720, %v680
  %730 = vst.msk [vmem:[%s9 + $0x48] sm:$0xff] %vm720, %v681
  %731 = vst.msk [vmem:[%s9 + $0x50] sm:$0xff] %vm720, %v682
  %732 = vst.msk [vmem:[%s9 + $0x58] sm:$0xff] %vm720, %v683
  %733 = vst.msk [vmem:[%s9 + $0x60] sm:$0xff] %vm720, %v684
  %734 = vst.msk [vmem:[%s9 + $0x68] sm:$0xff] %vm720, %v685
  %735 = vst.msk [vmem:[%s9 + $0x70] sm:$0xff] %vm720, %v686
  %736 = vst.msk [vmem:[%s9 + $0x78] sm:$0xff] %vm720, %v687
  %737 = vst.msk [vmem:[%s9 + $0x80] sm:$0xff] %vm720, %v704
  %738 = vst.msk [vmem:[%s9 + $0x88] sm:$0xff] %vm720, %v705
  %739 = vst.msk [vmem:[%s9 + $0x90] sm:$0xff] %vm720, %v706
  %740 = vst.msk [vmem:[%s9 + $0x98] sm:$0xff] %vm720, %v707
  %741 = vst.msk [vmem:[%s9 + $0xa0] sm:$0xff] %vm720, %v708
  %742 = vst.msk [vmem:[%s9 + $0xa8] sm:$0xff] %vm720, %v709
  %743 = vst.msk [vmem:[%s9 + $0xb0] sm:$0xff] %vm720, %v710
  %744 = vst.msk [vmem:[%s9 + $0xb8] sm:$0xff] %vm720, %v711
  %745 = vst.msk [vmem:[%s9 + $0xc0] sm:$0xff] %vm720, %v712
  %746 = vst.msk [vmem:[%s9 + $0xc8] sm:$0xff] %vm720, %v713
  %747 = vst.msk [vmem:[%s9 + $0xd0] sm:$0xff] %vm720, %v714
  %748 = vst.msk [vmem:[%s9 + $0xd8] sm:$0xff] %vm720, %v715
  %749 = vst.msk [vmem:[%s9 + $0xe0] sm:$0xff] %vm720, %v716
  %750 = vst.msk [vmem:[%s9 + $0xe8] sm:$0xff] %vm720, %v717
  %751 = vst.msk [vmem:[%s9 + $0xf0] sm:$0xff] %vm720, %v718
  %752 = vst.msk [vmem:[%s9 + $0xf8] sm:$0xff] %vm720, %v719
  // Predicated region
  $region38: #{relational_model.1} parent=0 // pred_check
    _
  $region39: #{relational_model.1} parent=0 // pred_check_branch
    %754 = sbr.rel (0) target = $region41
  $region40: #{relational_model.1} parent=0 // pred_region
    _
  $region41: #{relational_model.1} parent=0 // pred_fallthru
    _
  // Predicated region
  $region42: #{relational_model.1} parent=0 // pred_check
    _
  $region43: #{relational_model.1} parent=0 // pred_check_branch
    %756 = sbr.rel (0) target = $region45
  $region44: #{relational_model.1} parent=0 // pred_region
    _
  $region45: #{relational_model.1} parent=0 // pred_fallthru
    _

// kernel: relational_model.1
$region0: #{relational_model.1}
  #allocation0 [shape = 'u32[]', space=smem, size = 0x4, offset = 0x4, fixed_abs, tag = 'smem constant byte address 0x4 - core index']
  #allocation1 [shape = 'u32[144,128]{1,0:T(1,128)}', space=vmem, size = 0x12000, scoped, tag = 'internal scratch']
  %s0 = inlined_call_operand.vmem [shape: f32[256,6], index: 0, kind: input, shape index: {}]
  %s1 = inlined_call_operand.vmem [shape: f32[32,6], index: 1, kind: input, shape index: {}]
  %s2 = inlined_call_operand.vmem [shape: f32[32,1], index: 2, kind: input, shape index: {}]
  %s3 = inlined_call_operand.vmem [shape: f32[32,32], index: 3, kind: input, shape index: {}]
  %s4 = inlined_call_operand.vmem [shape: f32[32,1], index: 4, kind: input, shape index: {}]
  %s5 = inlined_call_operand.vmem [shape: f32[32,32], index: 5, kind: input, shape index: {}]
  %s6 = inlined_call_operand.vmem [shape: f32[32,1], index: 6, kind: input, shape index: {}]
  %s7 = inlined_call_operand.vmem [shape: f32[8,32], index: 7, kind: input, shape index: {}]
  %s8 = inlined_call_operand.vmem [shape: f32[8,1], index: 8, kind: input, shape index: {}]
  %s9 = inlined_call_operand.vmem [shape: f32[8,256], index: 9, kind: output, shape index: {}]
  %s10 = sld [smem:[#allocation0]]
  $region46: #{relational_model.1} parent=0
    _
  %s12 = ssub.s32 1, %s10
  %s13 = scalar_select 0, %s12, %s10
  // Predicated region
  $region2: #{relational_model.1} parent=0 // pred_check
    _
  $region3: #{relational_model.1} parent=0 // pred_check_branch
    %15 = sbr.rel (0) target = $region5
  $region4: #{relational_model.1} parent=0 // pred_region
    _
  $region5: #{relational_model.1} parent=0 // pred_fallthru
    _
  // Predicated region
  $region6: #{relational_model.1} parent=0 // pred_check
    _
  $region7: #{relational_model.1} parent=0 // pred_check_branch
    %17 = sbr.rel (0) target = $region9
  $region8: #{relational_model.1} parent=0 // pred_region
    _
  $region9: #{relational_model.1} parent=0 // pred_fallthru
    _
  // Predicated region
  $region10: #{relational_model.1} parent=0 // pred_check
    _
  $region11: #{relational_model.1} parent=0 // pred_check_branch
    %19 = sbr.rel (0) target = $region13
  $region12: #{relational_model.1} parent=0 // pred_region
    _
  $region13: #{relational_model.1} parent=0 // pred_fallthru
    _
  // Predicated region
  $region14: #{relational_model.1} parent=0 // pred_check
    _
  $region15: #{relational_model.1} parent=0 // pred_check_branch
    %21 = sbr.rel (0) target = $region17
  $region16: #{relational_model.1} parent=0 // pred_region
    _
  $region17: #{relational_model.1} parent=0 // pred_fallthru
    _
  // Predicated region
  $region18: #{relational_model.1} parent=0 // pred_check
    _
  $region19: #{relational_model.1} parent=0 // pred_check_branch
    %23 = sbr.rel (0) target = $region21
  $region20: #{relational_model.1} parent=0 // pred_region
    _
  $region21: #{relational_model.1} parent=0 // pred_fallthru
    _
  // Predicated region
  $region22: #{relational_model.1} parent=0 // pred_check
    _
  $region23: #{relational_model.1} parent=0 // pred_check_branch
    %25 = sbr.rel (0) target = $region25
  $region24: #{relational_model.1} parent=0 // pred_region
    _
  $region25: #{relational_model.1} parent=0 // pred_fallthru
    _
  // Predicated region
  $region26: #{relational_model.1} parent=0 // pred_check
    _
  $region27: #{relational_model.1} parent=0 // pred_check_branch
    %27 = sbr.rel (0) target = $region29
  $region28: #{relational_model.1} parent=0 // pred_region
    _
  $region29: #{relational_model.1} parent=0 // pred_fallthru
    _
  // Predicated region
  $region30: #{relational_model.1} parent=0 // pred_check
    _
  $region31: #{relational_model.1} parent=0 // pred_check_branch
    %29 = sbr.rel (0) target = $region33
  $region32: #{relational_model.1} parent=0 // pred_region
    _
  $region33: #{relational_model.1} parent=0 // pred_fallthru
    _
  // Predicated region
  $region34: #{relational_model.1} parent=0 // pred_check
    _
  $region35: #{relational_model.1} parent=0 // pred_check_branch
    %31 = sbr.rel (0) target = $region37
  $region36: #{relational_model.1} parent=0 // pred_region
    _
  $region37: #{relational_model.1} parent=0 // pred_fallthru
    _
  %v32 = vld [vmem:[%s0] sm:$0xff]
  %v33 = vld [vmem:[%s0 + $0x8] sm:$0xff]
  %v34 = vld [vmem:[%s0 + $0x10] sm:$0xff]
  %v35 = vld [vmem:[%s0 + $0x18] sm:$0xff]
  %v36 = vld [vmem:[%s0 + $0x20] sm:$0xff]
  %v37 = vld [vmem:[%s0 + $0x28] sm:$0xff]
  %v38 = vld [vmem:[%s0 + $0x30] sm:$0xff]
  %v39 = vld [vmem:[%s0 + $0x38] sm:$0xff]
  %v40 = vld [vmem:[%s0 + $0x40] sm:$0xff]
  %v41 = vld [vmem:[%s0 + $0x48] sm:$0xff]
  %v42 = vld [vmem:[%s0 + $0x50] sm:$0xff]
  %v43 = vld [vmem:[%s0 + $0x58] sm:$0xff]
  %v44 = vld [vmem:[%s0 + $0x60] sm:$0xff]
  %v45 = vld [vmem:[%s0 + $0x68] sm:$0xff]
  %v46 = vld [vmem:[%s0 + $0x70] sm:$0xff]
  %v47 = vld [vmem:[%s0 + $0x78] sm:$0xff]
  %v48 = vld [vmem:[%s0 + $0x80] sm:$0xff]
  %v49 = vld [vmem:[%s0 + $0x88] sm:$0xff]
  %v50 = vld [vmem:[%s0 + $0x90] sm:$0xff]
  %v51 = vld [vmem:[%s0 + $0x98] sm:$0xff]
  %v52 = vld [vmem:[%s0 + $0xa0] sm:$0xff]
  %v53 = vld [vmem:[%s0 + $0xa8] sm:$0xff]
  %v54 = vld [vmem:[%s0 + $0xb0] sm:$0xff]
  %v55 = vld [vmem:[%s0 + $0xb8] sm:$0xff]
  %v56 = vld [vmem:[%s0 + $0xc0] sm:$0xff]
  %v57 = vld [vmem:[%s0 + $0xc8] sm:$0xff]
  %v58 = vld [vmem:[%s0 + $0xd0] sm:$0xff]
  %v59 = vld [vmem:[%s0 + $0xd8] sm:$0xff]
  %v60 = vld [vmem:[%s0 + $0xe0] sm:$0xff]
  %v61 = vld [vmem:[%s0 + $0xe8] sm:$0xff]
  %v62 = vld [vmem:[%s0 + $0xf0] sm:$0xff]
  %v63 = vld [vmem:[%s0 + $0xf8] sm:$0xff]
  %v64 = vld [vmem:[%s1] sm:$0xff]
  %v65 = vld [vmem:[%s1 + $0x8] sm:$0xff]
  %v66 = vld [vmem:[%s1 + $0x10] sm:$0xff]
  %v67 = vld [vmem:[%s1 + $0x18] sm:$0xff]
  %v68 = vld [vmem:[%s2] sm:$0xff]
  %v69 = vld [vmem:[%s2 + $0x8] sm:$0xff]
  %v70 = vld [vmem:[%s2 + $0x10] sm:$0xff]
  %v71 = vld [vmem:[%s2 + $0x18] sm:$0xff]
  %73 = vset.pattern.permute.xlu0 0
  %74 = vperm.xlu0 %73, %v68
  %v75 = vpop.permute.xlu0 %74
  %78 = vset.pattern.permute.xlu0 0
  %79 = vperm.xlu0 %78, %v69
  %v80 = vpop.permute.xlu0 %79
  %83 = vset.pattern.permute.xlu0 0
  %84 = vperm.xlu0 %83, %v70
  %v85 = vpop.permute.xlu0 %84
  %88 = vset.pattern.permute.xlu0 0
  %89 = vperm.xlu0 %88, %v71
  %v90 = vpop.permute.xlu0 %89
  %vm92 = vcmask 48128
  %v94 = vsel %vm92, %v64, 0
  %v97 = vsel %vm92, %v65, 0
  %v100 = vsel %vm92, %v66, 0
  %v103 = vsel %vm92, %v67, 0
  %v106 = vsel %vm92, %v32, 0
  %v109 = vsel %vm92, %v33, 0
  %v112 = vsel %vm92, %v34, 0
  %v115 = vsel %vm92, %v35, 0
  %v118 = vsel %vm92, %v36, 0
  %v121 = vsel %vm92, %v37, 0
  %v124 = vsel %vm92, %v38, 0
  %v127 = vsel %vm92, %v39, 0
  %v130 = vsel %vm92, %v40, 0
  %v133 = vsel %vm92, %v41, 0
  %v136 = vsel %vm92, %v42, 0
  %v139 = vsel %vm92, %v43, 0
  %v142 = vsel %vm92, %v44, 0
  %v145 = vsel %vm92, %v45, 0
  %v148 = vsel %vm92, %v46, 0
  %v151 = vsel %vm92, %v47, 0
  %v154 = vsel %vm92, %v48, 0
  %v157 = vsel %vm92, %v49, 0
  %v160 = vsel %vm92, %v50, 0
  %v163 = vsel %vm92, %v51, 0
  %v166 = vsel %vm92, %v52, 0
  %v169 = vsel %vm92, %v53, 0
  %v172 = vsel %vm92, %v54, 0
  %v175 = vsel %vm92, %v55, 0
  %v178 = vsel %vm92, %v56, 0
  %v181 = vsel %vm92, %v57, 0
  %v184 = vsel %vm92, %v58, 0
  %v187 = vsel %vm92, %v59, 0
  %v190 = vsel %vm92, %v60, 0
  %v193 = vsel %vm92, %v61, 0
  %v196 = vsel %vm92, %v62, 0
  %v199 = vsel %vm92, %v63, 0
  %201 = vmatprep.subr.mxu0 0.0
  %202 = vmatpush1.xpose.msra.mxu0 %v106
  %203 = vmatprep.subr.mxu0 0.0
  %204 = vmatpush1.xpose.msra.mxu0 %v109
  %205 = vmatprep.subr.mxu0 0.0
  %206 = vmatpush1.xpose.msra.mxu0 %v112
  %207 = vmatprep.subr.mxu0 0.0
  %208 = vmatpush1.xpose.msra.mxu0 %v115
  %209 = vmatprep.subr.mxu0 0.0
  %210 = vmatpush1.xpose.msra.mxu0 %v118
  %211 = vmatprep.subr.mxu0 0.0
  %212 = vmatpush1.xpose.msra.mxu0 %v121
  %213 = vmatprep.subr.mxu0 0.0
  %214 = vmatpush1.xpose.msra.mxu0 %v124
  %215 = vmatprep.subr.mxu0 0.0
  %216 = vmatpush1.xpose.msra.mxu0 %v127
  %217 = vmatprep.subr.mxu0 0.0
  %218 = vmatpush1.xpose.msra.mxu0 %v130
  %219 = vmatprep.subr.mxu0 0.0
  %220 = vmatpush1.xpose.msra.mxu0 %v133
  %221 = vmatprep.subr.mxu0 0.0
  %222 = vmatpush1.xpose.msra.mxu0 %v136
  %223 = vmatprep.subr.mxu0 0.0
  %224 = vmatpush1.xpose.msra.mxu0 %v139
  %225 = vmatprep.subr.mxu0 0.0
  %226 = vmatpush1.xpose.msra.mxu0 %v142
  %227 = vmatprep.subr.mxu0 0.0
  %228 = vmatpush1.xpose.msra.mxu0 %v145
  %229 = vmatprep.subr.mxu0 0.0
  %230 = vmatpush1.xpose.msra.mxu0 %v148
  %231 = vmatprep.subr.mxu0 0.0
  %232 = vmatpush1.xpose.msra.mxu0 %v151
  %233 = vmatprep.subr.mxu0 0.0
  %234 = vmatpush1.xpose.msra.mxu0 %v154
  %235 = vmatprep.subr.mxu0 0.0
  %236 = vmatpush1.xpose.msra.mxu0 %v157
  %237 = vmatprep.subr.mxu0 0.0
  %238 = vmatpush1.xpose.msra.mxu0 %v160
  %239 = vmatprep.subr.mxu0 0.0
  %240 = vmatpush1.xpose.msra.mxu0 %v163
  %241 = vmatprep.subr.mxu0 0.0
  %242 = vmatpush1.xpose.msra.mxu0 %v166
  %243 = vmatprep.subr.mxu0 0.0
  %244 = vmatpush1.xpose.msra.mxu0 %v169
  %245 = vmatprep.subr.mxu0 0.0
  %246 = vmatpush1.xpose.msra.mxu0 %v172
  %247 = vmatprep.subr.mxu0 0.0
  %248 = vmatpush1.xpose.msra.mxu0 %v175
  %249 = vmatprep.subr.mxu0 0.0
  %250 = vmatpush1.xpose.msra.mxu0 %v178
  %251 = vmatprep.subr.mxu0 0.0
  %252 = vmatpush1.xpose.msra.mxu0 %v181
  %253 = vmatprep.subr.mxu0 0.0
  %254 = vmatpush1.xpose.msra.mxu0 %v184
  %255 = vmatprep.subr.mxu0 0.0
  %256 = vmatpush1.xpose.msra.mxu0 %v187
  %257 = vmatprep.subr.mxu0 0.0
  %258 = vmatpush1.xpose.msra.mxu0 %v190
  %259 = vmatprep.subr.mxu0 0.0
  %260 = vmatpush1.xpose.msra.mxu0 %v193
  %261 = vmatprep.subr.mxu0 0.0
  %262 = vmatpush1.xpose.msra.mxu0 %v196
  %263 = vmatprep.subr.mxu0 0.0
  %264 = vmatpush1.xpose.msra.mxu0 %v199
  %265 = vmatprep.mubr.f32.mxu0 0.0
  %266 = vmatmul.mubr.f32.gmra.mrb[0].mxu0 %v94
  %v267 = vpop.f32.mrb[0].mxu0
  %v268 = vadd.f32 %v75, %v267
  %v269 = vpop.f32.mrb[0].mxu0
  %v270 = vadd.f32 %v75, %v269
  %271 = vmatprep.mubr.f32.mxu0 0.0
  %272 = vmatmul.mubr.f32.gmra.mrb[0].mxu0 %v97
  %v273 = vpop.f32.mrb[0].mxu0
  %v274 = vadd.f32 %v80, %v273
  %v275 = vpop.f32.mrb[0].mxu0
  %v276 = vadd.f32 %v80, %v275
  %277 = vmatprep.mubr.f32.mxu0 0.0
  %278 = vmatmul.mubr.f32.gmra.mrb[0].mxu0 %v100
  %v279 = vpop.f32.mrb[0].mxu0
  %v280 = vadd.f32 %v85, %v279
  %v281 = vpop.f32.mrb[0].mxu0
  %v282 = vadd.f32 %v85, %v281
  %283 = vmatprep.mubr.f32.mxu0 0.0
  %284 = vmatmul.mubr.f32.gmra.mrb[0].mxu0 %v103
  %v285 = vpop.f32.mrb[0].mxu0
  %v286 = vadd.f32 %v90, %v285
  %v287 = vpop.f32.mrb[0].mxu0
  %v288 = vadd.f32 %v90, %v287
  %289 = vdwg.mxu0
  %v290 = vmax.f32 %v268, 0.0
  %v291 = vmax.f32 %v270, 0.0
  %v292 = vmax.f32 %v274, 0.0
  %v293 = vmax.f32 %v276, 0.0
  %v294 = vmax.f32 %v280, 0.0
  %v295 = vmax.f32 %v282, 0.0
  %v296 = vmax.f32 %v286, 0.0
  %v297 = vmax.f32 %v288, 0.0
  %v298 = vld [vmem:[%s3] sm:$0xff]
  %v299 = vld [vmem:[%s3 + $0x8] sm:$0xff]
  %v300 = vld [vmem:[%s3 + $0x10] sm:$0xff]
  %v301 = vld [vmem:[%s3 + $0x18] sm:$0xff]
  %v302 = vld [vmem:[%s4] sm:$0xff]
  %v303 = vld [vmem:[%s4 + $0x8] sm:$0xff]
  %v304 = vld [vmem:[%s4 + $0x10] sm:$0xff]
  %v305 = vld [vmem:[%s4 + $0x18] sm:$0xff]
  %307 = vset.pattern.permute.xlu0 0
  %308 = vperm.xlu0 %307, %v302
  %v309 = vpop.permute.xlu0 %308
  %312 = vset.pattern.permute.xlu0 0
  %313 = vperm.xlu0 %312, %v303
  %v314 = vpop.permute.xlu0 %313
  %317 = vset.pattern.permute.xlu0 0
  %318 = vperm.xlu0 %317, %v304
  %v319 = vpop.permute.xlu0 %318
  %322 = vset.pattern.permute.xlu0 0
  %323 = vperm.xlu0 %322, %v305
  %v324 = vpop.permute.xlu0 %323
  %vm326 = vcmask 261120
  %v328 = vsel %vm326, %v298, 0
  %v331 = vsel %vm326, %v299, 0
  %v334 = vsel %vm326, %v300, 0
  %v337 = vsel %vm326, %v301, 0
  %339 = vmatprep.subr.mxu0 %v291
  %340 = vmatpush1.msra.mxu0 %v290
  %341 = vmatprep.subr.mxu0 %v293
  %342 = vmatpush1.msra.mxu0 %v292
  %343 = vmatprep.subr.mxu0 %v295
  %344 = vmatpush1.msra.mxu0 %v294
  %345 = vmatprep.subr.mxu0 %v297
  %346 = vmatpush1.msra.mxu0 %v296
  %347 = vmatprep.subr.mxu0 0.0
  %348 = vmatpush1.msra.mxu0 0.0
  %349 = vmatprep.subr.mxu0 0.0
  %350 = vmatpush1.msra.mxu0 0.0
  %351 = vmatprep.subr.mxu0 0.0
  %352 = vmatpush1.msra.mxu0 0.0
  %353 = vmatprep.subr.mxu0 0.0
  %354 = vmatpush1.msra.mxu0 0.0
  %355 = vmatprep.subr.mxu0 0.0
  %356 = vmatpush1.msra.mxu0 0.0
  %357 = vmatprep.subr.mxu0 0.0
  %358 = vmatpush1.msra.mxu0 0.0
  %359 = vmatprep.subr.mxu0 0.0
  %360 = vmatpush1.msra.mxu0 0.0
  %361 = vmatprep.subr.mxu0 0.0
  %362 = vmatpush1.msra.mxu0 0.0
  %363 = vmatprep.subr.mxu0 0.0
  %364 = vmatpush1.msra.mxu0 0.0
  %365 = vmatprep.subr.mxu0 0.0
  %366 = vmatpush1.msra.mxu0 0.0
  %367 = vmatprep.subr.mxu0 0.0
  %368 = vmatpush1.msra.mxu0 0.0
  %369 = vmatprep.subr.mxu0 0.0
  %370 = vmatpush1.msra.mxu0 0.0
  %371 = vmatprep.subr.mxu0 0.0
  %372 = vmatpush1.msra.mxu0 0.0
  %373 = vmatprep.subr.mxu0 0.0
  %374 = vmatpush1.msra.mxu0 0.0
  %375 = vmatprep.subr.mxu0 0.0
  %376 = vmatpush1.msra.mxu0 0.0
  %377 = vmatprep.subr.mxu0 0.0
  %378 = vmatpush1.msra.mxu0 0.0
  %379 = vmatprep.subr.mxu0 0.0
  %380 = vmatpush1.msra.mxu0 0.0
  %381 = vmatprep.subr.mxu0 0.0
  %382 = vmatpush1.msra.mxu0 0.0
  %383 = vmatprep.subr.mxu0 0.0
  %384 = vmatpush1.msra.mxu0 0.0
  %385 = vmatprep.subr.mxu0 0.0
  %386 = vmatpush1.msra.mxu0 0.0
  %387 = vmatprep.subr.mxu0 0.0
  %388 = vmatpush1.msra.mxu0 0.0
  %389 = vmatprep.subr.mxu0 0.0
  %390 = vmatpush1.msra.mxu0 0.0
  %391 = vmatprep.subr.mxu0 0.0
  %392 = vmatpush1.msra.mxu0 0.0
  %393 = vmatprep.subr.mxu0 0.0
  %394 = vmatpush1.msra.mxu0 0.0
  %395 = vmatprep.subr.mxu0 0.0
  %396 = vmatpush1.msra.mxu0 0.0
  %397 = vmatprep.subr.mxu0 0.0
  %398 = vmatpush1.msra.mxu0 0.0
  %399 = vmatprep.subr.mxu0 0.0
  %400 = vmatpush1.msra.mxu0 0.0
  %401 = vmatprep.subr.mxu0 0.0
  %402 = vmatpush1.msra.mxu0 0.0
  %403 = vmatprep.mubr.f32.mxu0 0.0
  %404 = vmatmul.mubr.f32.gmra.mrb[0].mxu0 %v328
  %v405 = vpop.f32.mrb[0].mxu0
  %v406 = vadd.f32 %v309, %v405
  %v407 = vpop.f32.mrb[0].mxu0
  %v408 = vadd.f32 %v309, %v407
  %409 = vmatprep.mubr.f32.mxu0 0.0
  %410 = vmatmul.mubr.f32.gmra.mrb[0].mxu0 %v331
  %v411 = vpop.f32.mrb[0].mxu0
  %v412 = vadd.f32 %v314, %v411
  %v413 = vpop.f32.mrb[0].mxu0
  %v414 = vadd.f32 %v314, %v413
  %415 = vmatprep.mubr.f32.mxu0 0.0
  %416 = vmatmul.mubr.f32.gmra.mrb[0].mxu0 %v334
  %v417 = vpop.f32.mrb[0].mxu0
  %v418 = vadd.f32 %v319, %v417
  %v419 = vpop.f32.mrb[0].mxu0
  %v420 = vadd.f32 %v319, %v419
  %421 = vmatprep.mubr.f32.mxu0 0.0
  %422 = vmatmul.mubr.f32.gmra.mrb[0].mxu0 %v337
  %v423 = vpop.f32.mrb[0].mxu0
  %v424 = vadd.f32 %v324, %v423
  %v425 = vpop.f32.mrb[0].mxu0
  %v426 = vadd.f32 %v324, %v425
  %427 = vdwg.mxu0
  %v428 = vmax.f32 %v406, 0.0
  %v429 = vmax.f32 %v408, 0.0
  %v430 = vmax.f32 %v412, 0.0
  %v431 = vmax.f32 %v414, 0.0
  %v432 = vmax.f32 %v418, 0.0
  %v433 = vmax.f32 %v420, 0.0
  %v434 = vmax.f32 %v424, 0.0
  %v435 = vmax.f32 %v426, 0.0
  %v436 = vld [vmem:[%s5] sm:$0xff]
  %v437 = vld [vmem:[%s5 + $0x8] sm:$0xff]
  %v438 = vld [vmem:[%s5 + $0x10] sm:$0xff]
  %v439 = vld [vmem:[%s5 + $0x18] sm:$0xff]
  %v440 = vld [vmem:[%s6] sm:$0xff]
  %v441 = vld [vmem:[%s6 + $0x8] sm:$0xff]
  %v442 = vld [vmem:[%s6 + $0x10] sm:$0xff]
  %v443 = vld [vmem:[%s6 + $0x18] sm:$0xff]
  %445 = vset.pattern.permute.xlu0 0
  %446 = vperm.xlu0 %445, %v440
  %v447 = vpop.permute.xlu0 %446
  %450 = vset.pattern.permute.xlu0 0
  %451 = vperm.xlu0 %450, %v441
  %v452 = vpop.permute.xlu0 %451
  %455 = vset.pattern.permute.xlu0 0
  %456 = vperm.xlu0 %455, %v442
  %v457 = vpop.permute.xlu0 %456
  %460 = vset.pattern.permute.xlu0 0
  %461 = vperm.xlu0 %460, %v443
  %v462 = vpop.permute.xlu0 %461
  %v465 = vsel %vm326, %v436, 0
  %v468 = vsel %vm326, %v437, 0
  %v471 = vsel %vm326, %v438, 0
  %v474 = vsel %vm326, %v439, 0
  %476 = vmatprep.subr.mxu0 %v429
  %477 = vmatpush1.msra.mxu0 %v428
  %478 = vmatprep.subr.mxu0 %v431
  %479 = vmatpush1.msra.mxu0 %v430
  %480 = vmatprep.subr.mxu0 %v433
  %481 = vmatpush1.msra.mxu0 %v432
  %482 = vmatprep.subr.mxu0 %v435
  %483 = vmatpush1.msra.mxu0 %v434
  %484 = vmatprep.subr.mxu0 0.0
  %485 = vmatpush1.msra.mxu0 0.0
  %486 = vmatprep.subr.mxu0 0.0
  %487 = vmatpush1.msra.mxu0 0.0
  %488 = vmatprep.subr.mxu0 0.0
  %489 = vmatpush1.msra.mxu0 0.0
  %490 = vmatprep.subr.mxu0 0.0
  %491 = vmatpush1.msra.mxu0 0.0
  %492 = vmatprep.subr.mxu0 0.0
  %493 = vmatpush1.msra.mxu0 0.0
  %494 = vmatprep.subr.mxu0 0.0
  %495 = vmatpush1.msra.mxu0 0.0
  %496 = vmatprep.subr.mxu0 0.0
  %497 = vmatpush1.msra.mxu0 0.0
  %498 = vmatprep.subr.mxu0 0.0
  %499 = vmatpush1.msra.mxu0 0.0
  %500 = vmatprep.subr.mxu0 0.0
  %501 = vmatpush1.msra.mxu0 0.0
  %502 = vmatprep.subr.mxu0 0.0
  %503 = vmatpush1.msra.mxu0 0.0
  %504 = vmatprep.subr.mxu0 0.0
  %505 = vmatpush1.msra.mxu0 0.0
  %506 = vmatprep.subr.mxu0 0.0
  %507 = vmatpush1.msra.mxu0 0.0
  %508 = vmatprep.subr.mxu0 0.0
  %509 = vmatpush1.msra.mxu0 0.0
  %510 = vmatprep.subr.mxu0 0.0
  %511 = vmatpush1.msra.mxu0 0.0
  %512 = vmatprep.subr.mxu0 0.0
  %513 = vmatpush1.msra.mxu0 0.0
  %514 = vmatprep.subr.mxu0 0.0
  %515 = vmatpush1.msra.mxu0 0.0
  %516 = vmatprep.subr.mxu0 0.0
  %517 = vmatpush1.msra.mxu0 0.0
  %518 = vmatprep.subr.mxu0 0.0
  %519 = vmatpush1.msra.mxu0 0.0
  %520 = vmatprep.subr.mxu0 0.0
  %521 = vmatpush1.msra.mxu0 0.0
  %522 = vmatprep.subr.mxu0 0.0
  %523 = vmatpush1.msra.mxu0 0.0
  %524 = vmatprep.subr.mxu0 0.0
  %525 = vmatpush1.msra.mxu0 0.0
  %526 = vmatprep.subr.mxu0 0.0
  %527 = vmatpush1.msra.mxu0 0.0
  %528 = vmatprep.subr.mxu0 0.0
  %529 = vmatpush1.msra.mxu0 0.0
  %530 = vmatprep.subr.mxu0 0.0
  %531 = vmatpush1.msra.mxu0 0.0
  %532 = vmatprep.subr.mxu0 0.0
  %533 = vmatpush1.msra.mxu0 0.0
  %534 = vmatprep.subr.mxu0 0.0
  %535 = vmatpush1.msra.mxu0 0.0
  %536 = vmatprep.subr.mxu0 0.0
  %537 = vmatpush1.msra.mxu0 0.0
  %538 = vmatprep.subr.mxu0 0.0
  %539 = vmatpush1.msra.mxu0 0.0
  %540 = vmatprep.mubr.f32.mxu0 0.0
  %541 = vmatmul.mubr.f32.gmra.mrb[0].mxu0 %v465
  %v542 = vpop.f32.mrb[0].mxu0
  %v543 = vadd.f32 %v447, %v542
  %v544 = vpop.f32.mrb[0].mxu0
  %v545 = vadd.f32 %v447, %v544
  %546 = vmatprep.mubr.f32.mxu0 0.0
  %547 = vmatmul.mubr.f32.gmra.mrb[0].mxu0 %v468
  %v548 = vpop.f32.mrb[0].mxu0
  %v549 = vadd.f32 %v452, %v548
  %v550 = vpop.f32.mrb[0].mxu0
  %v551 = vadd.f32 %v452, %v550
  %552 = vmatprep.mubr.f32.mxu0 0.0
  %553 = vmatmul.mubr.f32.gmra.mrb[0].mxu0 %v471
  %v554 = vpop.f32.mrb[0].mxu0
  %v555 = vadd.f32 %v457, %v554
  %v556 = vpop.f32.mrb[0].mxu0
  %v557 = vadd.f32 %v457, %v556
  %558 = vmatprep.mubr.f32.mxu0 0.0
  %559 = vmatmul.mubr.f32.gmra.mrb[0].mxu0 %v474
  %v560 = vpop.f32.mrb[0].mxu0
  %v561 = vadd.f32 %v462, %v560
  %v562 = vpop.f32.mrb[0].mxu0
  %v563 = vadd.f32 %v462, %v562
  %564 = vdwg.mxu0
  %v565 = vmax.f32 %v543, 0.0
  %v566 = vmax.f32 %v545, 0.0
  %v567 = vmax.f32 %v549, 0.0
  %v568 = vmax.f32 %v551, 0.0
  %v569 = vmax.f32 %v555, 0.0
  %v570 = vmax.f32 %v557, 0.0
  %v571 = vmax.f32 %v561, 0.0
  %v572 = vmax.f32 %v563, 0.0
  %v573 = vld [vmem:[%s7] sm:$0xff]
  %v574 = vld [vmem:[%s8] sm:$0xff]
  %576 = vset.pattern.permute.xlu0 0
  %577 = vperm.xlu0 %576, %v574
  %v578 = vpop.permute.xlu0 %577
  %v581 = vsel %vm326, %v573, 0
  %583 = vmatprep.subr.mxu0 %v566
  %584 = vmatpush1.msra.mxu0 %v565
  %585 = vmatprep.subr.mxu0 %v568
  %586 = vmatpush1.msra.mxu0 %v567
  %587 = vmatprep.subr.mxu0 %v570
  %588 = vmatpush1.msra.mxu0 %v569
  %589 = vmatprep.subr.mxu0 %v572
  %590 = vmatpush1.msra.mxu0 %v571
  %591 = vmatprep.subr.mxu0 0.0
  %592 = vmatpush1.msra.mxu0 0.0
  %593 = vmatprep.subr.mxu0 0.0
  %594 = vmatpush1.msra.mxu0 0.0
  %595 = vmatprep.subr.mxu0 0.0
  %596 = vmatpush1.msra.mxu0 0.0
  %597 = vmatprep.subr.mxu0 0.0
  %598 = vmatpush1.msra.mxu0 0.0
  %599 = vmatprep.subr.mxu0 0.0
  %600 = vmatpush1.msra.mxu0 0.0
  %601 = vmatprep.subr.mxu0 0.0
  %602 = vmatpush1.msra.mxu0 0.0
  %603 = vmatprep.subr.mxu0 0.0
  %604 = vmatpush1.msra.mxu0 0.0
  %605 = vmatprep.subr.mxu0 0.0
  %606 = vmatpush1.msra.mxu0 0.0
  %607 = vmatprep.subr.mxu0 0.0
  %608 = vmatpush1.msra.mxu0 0.0
  %609 = vmatprep.subr.mxu0 0.0
  %610 = vmatpush1.msra.mxu0 0.0
  %611 = vmatprep.subr.mxu0 0.0
  %612 = vmatpush1.msra.mxu0 0.0
  %613 = vmatprep.subr.mxu0 0.0
  %614 = vmatpush1.msra.mxu0 0.0
  %615 = vmatprep.subr.mxu0 0.0
  %616 = vmatpush1.msra.mxu0 0.0
  %617 = vmatprep.subr.mxu0 0.0
  %618 = vmatpush1.msra.mxu0 0.0
  %619 = vmatprep.subr.mxu0 0.0
  %620 = vmatpush1.msra.mxu0 0.0
  %621 = vmatprep.subr.mxu0 0.0
  %622 = vmatpush1.msra.mxu0 0.0
  %623 = vmatprep.subr.mxu0 0.0
  %624 = vmatpush1.msra.mxu0 0.0
  %625 = vmatprep.subr.mxu0 0.0
  %626 = vmatpush1.msra.mxu0 0.0
  %627 = vmatprep.subr.mxu0 0.0
  %628 = vmatpush1.msra.mxu0 0.0
  %629 = vmatprep.subr.mxu0 0.0
  %630 = vmatpush1.msra.mxu0 0.0
  %631 = vmatprep.subr.mxu0 0.0
  %632 = vmatpush1.msra.mxu0 0.0
  %633 = vmatprep.subr.mxu0 0.0
  %634 = vmatpush1.msra.mxu0 0.0
  %635 = vmatprep.subr.mxu0 0.0
  %636 = vmatpush1.msra.mxu0 0.0
  %637 = vmatprep.subr.mxu0 0.0
  %638 = vmatpush1.msra.mxu0 0.0
  %639 = vmatprep.subr.mxu0 0.0
  %640 = vmatpush1.msra.mxu0 0.0
  %641 = vmatprep.subr.mxu0 0.0
  %642 = vmatpush1.msra.mxu0 0.0
  %643 = vmatprep.subr.mxu0 0.0
  %644 = vmatpush1.msra.mxu0 0.0
  %645 = vmatprep.subr.mxu0 0.0
  %646 = vmatpush1.msra.mxu0 0.0
  %647 = vmatprep.mubr.f32.mxu0 0.0
  %648 = vmatmul.mubr.f32.gmra.mrb[0].mxu0 %v581
  %v649 = vpop.f32.mrb[0].mxu0
  %v650 = vadd.f32 %v578, %v649
  %v651 = vpop.f32.mrb[0].mxu0
  %v652 = vadd.f32 %v578, %v651
  %653 = vdwg.mxu0
  %v654 = vmax.f32 %v650, 0.0
  %v655 = vmax.f32 %v652, 0.0
  %656 = vst [vmem:[%s9] sm:$0xff] %v654
  %657 = vst [vmem:[%s9 + $0x8] sm:$0xff] %v655
  // Predicated region
  $region38: #{relational_model.1} parent=0 // pred_check
    _
  $region39: #{relational_model.1} parent=0 // pred_check_branch
    %659 = sbr.rel (0) target = $region41
  $region40: #{relational_model.1} parent=0 // pred_region
    _
  $region41: #{relational_model.1} parent=0 // pred_fallthru
    _
  // Predicated region
  $region42: #{relational_model.1} parent=0 // pred_check
    _
  $region43: #{relational_model.1} parent=0 // pred_check_branch
    %661 = sbr.rel (0) target = $region45
  $region44: #{relational_model.1} parent=0 // pred_region
    _
  $region45: #{relational_model.1} parent=0 // pred_fallthru
    _

</llo_original>
